<compile_context>
chip_gen: v7x
topology: tpu7x:2x2x1
jax: 0.10.0
libtpu: 0.0.40
codegen_flags: <defaults>
</compile_context>

<pallas_src>
import jax
import jax.numpy as jnp
from jax import lax
from jax.experimental import pallas as pl
from jax.experimental.pallas import tpu as pltpu


def _conv_out_kernel(x_ref, w_ref, b_ref, o_ref, xp_ref):
    """x_ref : (1, Cin, H, W)    VMEM  current input image (NCHW block)
       w_ref : (Cout*Cin*9,)     SMEM  conv weights, idx = ((co*Cin+ci)*3+ky)*3+kx
       b_ref : (Cout,)           SMEM  bias
       o_ref : (1, Cout, H, W)   VMEM  current output image
       xp_ref: (Cin, H+2, W+2)   VMEM  scratch: zero-padded input planes
    """
    _, cin, h, w = x_ref.shape
    cout = o_ref.shape[1]

    # Fused padding=1: zero the (tiny) padded scratch and write the interior.
    # Zeroed every step so the kernel stays correct when the "parallel" batch
    # axis is split across TensorCores (no cross-step carried state).
    xp_ref[...] = jnp.zeros_like(xp_ref)
    xp_ref[:, pl.ds(1, h), pl.ds(1, w)] = x_ref[0]

    # 3x3 conv as 9*Cin*Cout scalar-broadcast multiply-accumulates on the VPU
    # over shifted (H, W) windows (cheap sublane/lane shifts, no im2col copies).
    acc = [None] * cout
    for ci in range(cin):
        plane = xp_ref[ci]                                   # (H+2, W+2)
        for ky in range(3):
            for kx in range(3):
                win = plane[ky:ky + h, kx:kx + w]            # shifted (H, W) window
                for co in range(cout):
                    wt = w_ref[((co * cin + ci) * 3 + ky) * 3 + kx]  # SMEM scalar
                    term = wt * win
                    acc[co] = term if acc[co] is None else acc[co] + term

    # Fused epilogue: bias + tanh/2 + 0.5.
    for co in range(cout):
        y = jnp.tanh(acc[co] + b_ref[co]) * 0.5 + 0.5
        o_ref[0, co, :, :] = y.astype(o_ref.dtype)


def conv_out_pallas(x_nchw, weight, bias):
    """x_nchw: (N, Cin, H, W) float32
       weight: (Cout, Cin, 3, 3) float32 (PyTorch conv layout)
       bias  : (Cout,) float32
       returns: (N, Cout, H, W) float32
    """
    n, cin, h, w = x_nchw.shape
    cout = weight.shape[0]

    # Flat SMEM scalar table; plain reshape of the PyTorch (Cout, Cin, 3, 3)
    # layout, so index = ((co*Cin+ci)*3+ky)*3+kx.  No transposes anywhere.
    w_flat = weight.reshape(cout * cin * 9)
    b = bias.reshape(cout)

    # Per-step VMEM: double-buffered in/out image blocks + padded scratch.
    block_bytes = 4 * (2 * cin * h * w + 2 * cout * h * w + cin * (h + 2) * (w + 2))
    vmem_limit = int(min(32 * 1024 * 1024, max(16 * 1024 * 1024, 8 * block_bytes)))

    cost = pl.CostEstimate(
        flops=2 * n * h * w * 9 * cin * cout,
        transcendentals=n * h * w * cout,
        bytes_accessed=4 * (n * cin * h * w + n * cout * h * w + cout * cin * 9 + cout),
    )

    return pl.pallas_call(
        _conv_out_kernel,
        out_shape=jax.ShapeDtypeStruct((n, cout, h, w), x_nchw.dtype),
        grid=(n,),
        in_specs=[
            pl.BlockSpec((1, cin, h, w), lambda i: (i, 0, 0, 0)),
            pl.BlockSpec(memory_space=pltpu.MemorySpace.SMEM),
            pl.BlockSpec(memory_space=pltpu.MemorySpace.SMEM),
        ],
        out_specs=pl.BlockSpec((1, cout, h, w), lambda i: (i, 0, 0, 0)),
        scratch_shapes=[pltpu.VMEM((cin, h + 2, w + 2), jnp.float32)],
        compiler_params=pltpu.CompilerParams(
            dimension_semantics=("parallel",),
            vmem_limit_bytes=vmem_limit,
        ),
        cost_estimate=cost,
    )(x_nchw, w_flat, b)


def conv_out_reference(x_nchw, weight, bias):
    """Plain-JAX reference (XLA conv) for correctness checking."""
    y = lax.conv_general_dilated(
        x_nchw, weight,
        window_strides=(1, 1),
        padding=((1, 1), (1, 1)),
        dimension_numbers=("NCHW", "OIHW", "NCHW"),
    )
    y = y + bias.reshape(1, -1, 1, 1)
    return jnp.tanh(y) / 2 + 0.5


if __name__ == "__main__":
    # Small shapes consistent with the module: N=2, in_ch=4, out_ch=4, 16x16 spatial.
    N, Cin, Cout, H, W = 2, 4, 4, 16, 16

    key = jax.random.PRNGKey(0)
    kx, kw, kb = jax.random.split(key, 3)
    x = jax.random.normal(kx, (N, Cin, H, W), dtype=jnp.float32)
    weight = 0.1 * jax.random.normal(kw, (Cout, Cin, 3, 3), dtype=jnp.float32)
    bias = 0.1 * jax.random.normal(kb, (Cout,), dtype=jnp.float32)

    out = jax.jit(conv_out_pallas)(x, weight, bias)
    out = jax.block_until_ready(out)

    ref = conv_out_reference(x, weight, bias)
    assert out.shape == (N, Cout, H, W)
    assert jnp.allclose(out, ref, atol=1e-5, rtol=1e-5), "mismatch vs reference"

    print("KERNEL_OK")
</pallas_src>

<mosaic_0001>
module attributes {stable_mosaic.version = 11 : i64} {
  func.func @_conv_out_kernel(%arg0: i32, %arg1: memref<1x4x16x16xf32, #tpu.memory_space<vmem>>, %arg2: memref<144xf32, #tpu.memory_space<smem>>, %arg3: memref<4xf32, #tpu.memory_space<smem>>, %arg4: memref<1x4x16x16xf32, #tpu.memory_space<vmem>>, %arg5: memref<4x18x18xf32, #tpu.memory_space<vmem>>) attributes {dimension_semantics = [#tpu.dimension_semantics<parallel>], iteration_bounds = array<i64: 2>, scalar_prefetch = 0 : i64, scratch_operands = 1 : i64, tpu.core_type = #tpu.core_type<tc>, window_params = [{transform_indices = @transform_0, window_bounds = array<i64: 1, 4, 16, 16>}, {transform_indices = @transform_1, window_bounds = array<i64: 144>}, {transform_indices = @transform_2, window_bounds = array<i64: 4>}, {transform_indices = @transform_3, window_bounds = array<i64: 1, 4, 16, 16>}]} {
    %cst = arith.constant 0.000000e+00 : f32
    %0 = vector.broadcast %cst : f32 to vector<4x18x18xf32>
    %c0 = arith.constant 0 : index
    %c0_0 = arith.constant 0 : index
    %c0_1 = arith.constant 0 : index
    %1 = vector.load %arg5[%c0, %c0_0, %c0_1] : memref<4x18x18xf32, #tpu.memory_space<vmem>>, vector<4x18x18xf32>
    tpu.vector_store %arg5[%c0, %c0_0, %c0_1], %0 {strides = array<i32>} : memref<4x18x18xf32, #tpu.memory_space<vmem>>, vector<4x18x18xf32>,
    %c0_2 = arith.constant 0 : index
    %c0_3 = arith.constant 0 : index
    %c0_4 = arith.constant 0 : index
    %c0_5 = arith.constant 0 : index
    %2 = vector.load %arg1[%c0_2, %c0_3, %c0_4, %c0_5] : memref<1x4x16x16xf32, #tpu.memory_space<vmem>>, vector<1x4x16x16xf32>
    %3 = vector.shape_cast %2 : vector<1x4x16x16xf32> to vector<4x16x16xf32>
    %c0_6 = arith.constant 0 : index
    %c1 = arith.constant 1 : index
    %c1_7 = arith.constant 1 : index
    %4 = vector.load %arg5[%c0_6, %c1, %c1_7] : memref<4x18x18xf32, #tpu.memory_space<vmem>>, vector<4x16x16xf32>
    tpu.vector_store %arg5[%c0_6, %c1, %c1_7], %3 {strides = array<i32>} : memref<4x18x18xf32, #tpu.memory_space<vmem>>, vector<4x16x16xf32>,
    %c0_8 = arith.constant 0 : index
    %c0_9 = arith.constant 0 : index
    %c0_10 = arith.constant 0 : index
    %5 = vector.load %arg5[%c0_8, %c0_9, %c0_10] : memref<4x18x18xf32, #tpu.memory_space<vmem>>, vector<1x18x18xf32>
    %6 = vector.shape_cast %5 : vector<1x18x18xf32> to vector<18x18xf32>
    %7 = vector.extract_strided_slice %6 {offsets = [0, 0], sizes = [16, 16], strides = [1, 1]} : vector<18x18xf32> to vector<16x16xf32>
    %c0_11 = arith.constant 0 : index
    %8 = memref.load %arg2[%c0_11] : memref<144xf32, #tpu.memory_space<smem>>
    %9 = vector.broadcast %8 : f32 to vector<16x16xf32>
    %10 = arith.mulf %9, %7 : vector<16x16xf32>
    %c36 = arith.constant 36 : index
    %11 = memref.load %arg2[%c36] : memref<144xf32, #tpu.memory_space<smem>>
    %12 = vector.broadcast %11 : f32 to vector<16x16xf32>
    %13 = arith.mulf %12, %7 : vector<16x16xf32>
    %c72 = arith.constant 72 : index
    %14 = memref.load %arg2[%c72] : memref<144xf32, #tpu.memory_space<smem>>
    %15 = vector.broadcast %14 : f32 to vector<16x16xf32>
    %16 = arith.mulf %15, %7 : vector<16x16xf32>
    %c108 = arith.constant 108 : index
    %17 = memref.load %arg2[%c108] : memref<144xf32, #tpu.memory_space<smem>>
    %18 = vector.broadcast %17 : f32 to vector<16x16xf32>
    %19 = arith.mulf %18, %7 : vector<16x16xf32>
    %20 = vector.extract_strided_slice %6 {offsets = [0, 1], sizes = [16, 16], strides = [1, 1]} : vector<18x18xf32> to vector<16x16xf32>
    %c1_12 = arith.constant 1 : index
    %21 = memref.load %arg2[%c1_12] : memref<144xf32, #tpu.memory_space<smem>>
    %22 = vector.broadcast %21 : f32 to vector<16x16xf32>
    %23 = arith.mulf %22, %20 : vector<16x16xf32>
    %24 = arith.addf %10, %23 : vector<16x16xf32>
    %c37 = arith.constant 37 : index
    %25 = memref.load %arg2[%c37] : memref<144xf32, #tpu.memory_space<smem>>
    %26 = vector.broadcast %25 : f32 to vector<16x16xf32>
    %27 = arith.mulf %26, %20 : vector<16x16xf32>
    %28 = arith.addf %13, %27 : vector<16x16xf32>
    %c73 = arith.constant 73 : index
    %29 = memref.load %arg2[%c73] : memref<144xf32, #tpu.memory_space<smem>>
    %30 = vector.broadcast %29 : f32 to vector<16x16xf32>
    %31 = arith.mulf %30, %20 : vector<16x16xf32>
    %32 = arith.addf %16, %31 : vector<16x16xf32>
    %c109 = arith.constant 109 : index
    %33 = memref.load %arg2[%c109] : memref<144xf32, #tpu.memory_space<smem>>
    %34 = vector.broadcast %33 : f32 to vector<16x16xf32>
    %35 = arith.mulf %34, %20 : vector<16x16xf32>
    %36 = arith.addf %19, %35 : vector<16x16xf32>
    %37 = vector.extract_strided_slice %6 {offsets = [0, 2], sizes = [16, 16], strides = [1, 1]} : vector<18x18xf32> to vector<16x16xf32>
    %c2 = arith.constant 2 : index
    %38 = memref.load %arg2[%c2] : memref<144xf32, #tpu.memory_space<smem>>
    %39 = vector.broadcast %38 : f32 to vector<16x16xf32>
    %40 = arith.mulf %39, %37 : vector<16x16xf32>
    %41 = arith.addf %24, %40 : vector<16x16xf32>
    %c38 = arith.constant 38 : index
    %42 = memref.load %arg2[%c38] : memref<144xf32, #tpu.memory_space<smem>>
    %43 = vector.broadcast %42 : f32 to vector<16x16xf32>
    %44 = arith.mulf %43, %37 : vector<16x16xf32>
    %45 = arith.addf %28, %44 : vector<16x16xf32>
    %c74 = arith.constant 74 : index
    %46 = memref.load %arg2[%c74] : memref<144xf32, #tpu.memory_space<smem>>
    %47 = vector.broadcast %46 : f32 to vector<16x16xf32>
    %48 = arith.mulf %47, %37 : vector<16x16xf32>
    %49 = arith.addf %32, %48 : vector<16x16xf32>
    %c110 = arith.constant 110 : index
    %50 = memref.load %arg2[%c110] : memref<144xf32, #tpu.memory_space<smem>>
    %51 = vector.broadcast %50 : f32 to vector<16x16xf32>
    %52 = arith.mulf %51, %37 : vector<16x16xf32>
    %53 = arith.addf %36, %52 : vector<16x16xf32>
    %54 = vector.extract_strided_slice %6 {offsets = [1, 0], sizes = [16, 16], strides = [1, 1]} : vector<18x18xf32> to vector<16x16xf32>
    %c3 = arith.constant 3 : index
    %55 = memref.load %arg2[%c3] : memref<144xf32, #tpu.memory_space<smem>>
    %56 = vector.broadcast %55 : f32 to vector<16x16xf32>
    %57 = arith.mulf %56, %54 : vector<16x16xf32>
    %58 = arith.addf %41, %57 : vector<16x16xf32>
    %c39 = arith.constant 39 : index
    %59 = memref.load %arg2[%c39] : memref<144xf32, #tpu.memory_space<smem>>
    %60 = vector.broadcast %59 : f32 to vector<16x16xf32>
    %61 = arith.mulf %60, %54 : vector<16x16xf32>
    %62 = arith.addf %45, %61 : vector<16x16xf32>
    %c75 = arith.constant 75 : index
    %63 = memref.load %arg2[%c75] : memref<144xf32, #tpu.memory_space<smem>>
    %64 = vector.broadcast %63 : f32 to vector<16x16xf32>
    %65 = arith.mulf %64, %54 : vector<16x16xf32>
    %66 = arith.addf %49, %65 : vector<16x16xf32>
    %c111 = arith.constant 111 : index
    %67 = memref.load %arg2[%c111] : memref<144xf32, #tpu.memory_space<smem>>
    %68 = vector.broadcast %67 : f32 to vector<16x16xf32>
    %69 = arith.mulf %68, %54 : vector<16x16xf32>
    %70 = arith.addf %53, %69 : vector<16x16xf32>
    %71 = vector.extract_strided_slice %6 {offsets = [1, 1], sizes = [16, 16], strides = [1, 1]} : vector<18x18xf32> to vector<16x16xf32>
    %c4 = arith.constant 4 : index
    %72 = memref.load %arg2[%c4] : memref<144xf32, #tpu.memory_space<smem>>
    %73 = vector.broadcast %72 : f32 to vector<16x16xf32>
    %74 = arith.mulf %73, %71 : vector<16x16xf32>
    %75 = arith.addf %58, %74 : vector<16x16xf32>
    %c40 = arith.constant 40 : index
    %76 = memref.load %arg2[%c40] : memref<144xf32, #tpu.memory_space<smem>>
    %77 = vector.broadcast %76 : f32 to vector<16x16xf32>
    %78 = arith.mulf %77, %71 : vector<16x16xf32>
    %79 = arith.addf %62, %78 : vector<16x16xf32>
    %c76 = arith.constant 76 : index
    %80 = memref.load %arg2[%c76] : memref<144xf32, #tpu.memory_space<smem>>
    %81 = vector.broadcast %80 : f32 to vector<16x16xf32>
    %82 = arith.mulf %81, %71 : vector<16x16xf32>
    %83 = arith.addf %66, %82 : vector<16x16xf32>
    %c112 = arith.constant 112 : index
    %84 = memref.load %arg2[%c112] : memref<144xf32, #tpu.memory_space<smem>>
    %85 = vector.broadcast %84 : f32 to vector<16x16xf32>
    %86 = arith.mulf %85, %71 : vector<16x16xf32>
    %87 = arith.addf %70, %86 : vector<16x16xf32>
    %88 = vector.extract_strided_slice %6 {offsets = [1, 2], sizes = [16, 16], strides = [1, 1]} : vector<18x18xf32> to vector<16x16xf32>
    %c5 = arith.constant 5 : index
    %89 = memref.load %arg2[%c5] : memref<144xf32, #tpu.memory_space<smem>>
    %90 = vector.broadcast %89 : f32 to vector<16x16xf32>
    %91 = arith.mulf %90, %88 : vector<16x16xf32>
    %92 = arith.addf %75, %91 : vector<16x16xf32>
    %c41 = arith.constant 41 : index
    %93 = memref.load %arg2[%c41] : memref<144xf32, #tpu.memory_space<smem>>
    %94 = vector.broadcast %93 : f32 to vector<16x16xf32>
    %95 = arith.mulf %94, %88 : vector<16x16xf32>
    %96 = arith.addf %79, %95 : vector<16x16xf32>
    %c77 = arith.constant 77 : index
    %97 = memref.load %arg2[%c77] : memref<144xf32, #tpu.memory_space<smem>>
    %98 = vector.broadcast %97 : f32 to vector<16x16xf32>
    %99 = arith.mulf %98, %88 : vector<16x16xf32>
    %100 = arith.addf %83, %99 : vector<16x16xf32>
    %c113 = arith.constant 113 : index
    %101 = memref.load %arg2[%c113] : memref<144xf32, #tpu.memory_space<smem>>
    %102 = vector.broadcast %101 : f32 to vector<16x16xf32>
    %103 = arith.mulf %102, %88 : vector<16x16xf32>
    %104 = arith.addf %87, %103 : vector<16x16xf32>
    %105 = vector.extract_strided_slice %6 {offsets = [2, 0], sizes = [16, 16], strides = [1, 1]} : vector<18x18xf32> to vector<16x16xf32>
    %c6 = arith.constant 6 : index
    %106 = memref.load %arg2[%c6] : memref<144xf32, #tpu.memory_space<smem>>
    %107 = vector.broadcast %106 : f32 to vector<16x16xf32>
    %108 = arith.mulf %107, %105 : vector<16x16xf32>
    %109 = arith.addf %92, %108 : vector<16x16xf32>
    %c42 = arith.constant 42 : index
    %110 = memref.load %arg2[%c42] : memref<144xf32, #tpu.memory_space<smem>>
    %111 = vector.broadcast %110 : f32 to vector<16x16xf32>
    %112 = arith.mulf %111, %105 : vector<16x16xf32>
    %113 = arith.addf %96, %112 : vector<16x16xf32>
    %c78 = arith.constant 78 : index
    %114 = memref.load %arg2[%c78] : memref<144xf32, #tpu.memory_space<smem>>
    %115 = vector.broadcast %114 : f32 to vector<16x16xf32>
    %116 = arith.mulf %115, %105 : vector<16x16xf32>
    %117 = arith.addf %100, %116 : vector<16x16xf32>
    %c114 = arith.constant 114 : index
    %118 = memref.load %arg2[%c114] : memref<144xf32, #tpu.memory_space<smem>>
    %119 = vector.broadcast %118 : f32 to vector<16x16xf32>
    %120 = arith.mulf %119, %105 : vector<16x16xf32>
    %121 = arith.addf %104, %120 : vector<16x16xf32>
    %122 = vector.extract_strided_slice %6 {offsets = [2, 1], sizes = [16, 16], strides = [1, 1]} : vector<18x18xf32> to vector<16x16xf32>
    %c7 = arith.constant 7 : index
    %123 = memref.load %arg2[%c7] : memref<144xf32, #tpu.memory_space<smem>>
    %124 = vector.broadcast %123 : f32 to vector<16x16xf32>
    %125 = arith.mulf %124, %122 : vector<16x16xf32>
    %126 = arith.addf %109, %125 : vector<16x16xf32>
    %c43 = arith.constant 43 : index
    %127 = memref.load %arg2[%c43] : memref<144xf32, #tpu.memory_space<smem>>
    %128 = vector.broadcast %127 : f32 to vector<16x16xf32>
    %129 = arith.mulf %128, %122 : vector<16x16xf32>
    %130 = arith.addf %113, %129 : vector<16x16xf32>
    %c79 = arith.constant 79 : index
    %131 = memref.load %arg2[%c79] : memref<144xf32, #tpu.memory_space<smem>>
    %132 = vector.broadcast %131 : f32 to vector<16x16xf32>
    %133 = arith.mulf %132, %122 : vector<16x16xf32>
    %134 = arith.addf %117, %133 : vector<16x16xf32>
    %c115 = arith.constant 115 : index
    %135 = memref.load %arg2[%c115] : memref<144xf32, #tpu.memory_space<smem>>
    %136 = vector.broadcast %135 : f32 to vector<16x16xf32>
    %137 = arith.mulf %136, %122 : vector<16x16xf32>
    %138 = arith.addf %121, %137 : vector<16x16xf32>
    %139 = vector.extract_strided_slice %6 {offsets = [2, 2], sizes = [16, 16], strides = [1, 1]} : vector<18x18xf32> to vector<16x16xf32>
    %c8 = arith.constant 8 : index
    %140 = memref.load %arg2[%c8] : memref<144xf32, #tpu.memory_space<smem>>
    %141 = vector.broadcast %140 : f32 to vector<16x16xf32>
    %142 = arith.mulf %141, %139 : vector<16x16xf32>
    %143 = arith.addf %126, %142 : vector<16x16xf32>
    %c44 = arith.constant 44 : index
    %144 = memref.load %arg2[%c44] : memref<144xf32, #tpu.memory_space<smem>>
    %145 = vector.broadcast %144 : f32 to vector<16x16xf32>
    %146 = arith.mulf %145, %139 : vector<16x16xf32>
    %147 = arith.addf %130, %146 : vector<16x16xf32>
    %c80 = arith.constant 80 : index
    %148 = memref.load %arg2[%c80] : memref<144xf32, #tpu.memory_space<smem>>
    %149 = vector.broadcast %148 : f32 to vector<16x16xf32>
    %150 = arith.mulf %149, %139 : vector<16x16xf32>
    %151 = arith.addf %134, %150 : vector<16x16xf32>
    %c116 = arith.constant 116 : index
    %152 = memref.load %arg2[%c116] : memref<144xf32, #tpu.memory_space<smem>>
    %153 = vector.broadcast %152 : f32 to vector<16x16xf32>
    %154 = arith.mulf %153, %139 : vector<16x16xf32>
    %155 = arith.addf %138, %154 : vector<16x16xf32>
    %c1_13 = arith.constant 1 : index
    %c0_14 = arith.constant 0 : index
    %c0_15 = arith.constant 0 : index
    %156 = vector.load %arg5[%c1_13, %c0_14, %c0_15] : memref<4x18x18xf32, #tpu.memory_space<vmem>>, vector<1x18x18xf32>
    %157 = vector.shape_cast %156 : vector<1x18x18xf32> to vector<18x18xf32>
    %158 = vector.extract_strided_slice %157 {offsets = [0, 0], sizes = [16, 16], strides = [1, 1]} : vector<18x18xf32> to vector<16x16xf32>
    %c9 = arith.constant 9 : index
    %159 = memref.load %arg2[%c9] : memref<144xf32, #tpu.memory_space<smem>>
    %160 = vector.broadcast %159 : f32 to vector<16x16xf32>
    %161 = arith.mulf %160, %158 : vector<16x16xf32>
    %162 = arith.addf %143, %161 : vector<16x16xf32>
    %c45 = arith.constant 45 : index
    %163 = memref.load %arg2[%c45] : memref<144xf32, #tpu.memory_space<smem>>
    %164 = vector.broadcast %163 : f32 to vector<16x16xf32>
    %165 = arith.mulf %164, %158 : vector<16x16xf32>
    %166 = arith.addf %147, %165 : vector<16x16xf32>
    %c81 = arith.constant 81 : index
    %167 = memref.load %arg2[%c81] : memref<144xf32, #tpu.memory_space<smem>>
    %168 = vector.broadcast %167 : f32 to vector<16x16xf32>
    %169 = arith.mulf %168, %158 : vector<16x16xf32>
    %170 = arith.addf %151, %169 : vector<16x16xf32>
    %c117 = arith.constant 117 : index
    %171 = memref.load %arg2[%c117] : memref<144xf32, #tpu.memory_space<smem>>
    %172 = vector.broadcast %171 : f32 to vector<16x16xf32>
    %173 = arith.mulf %172, %158 : vector<16x16xf32>
    %174 = arith.addf %155, %173 : vector<16x16xf32>
    %175 = vector.extract_strided_slice %157 {offsets = [0, 1], sizes = [16, 16], strides = [1, 1]} : vector<18x18xf32> to vector<16x16xf32>
    %c10 = arith.constant 10 : index
    %176 = memref.load %arg2[%c10] : memref<144xf32, #tpu.memory_space<smem>>
    %177 = vector.broadcast %176 : f32 to vector<16x16xf32>
    %178 = arith.mulf %177, %175 : vector<16x16xf32>
    %179 = arith.addf %162, %178 : vector<16x16xf32>
    %c46 = arith.constant 46 : index
    %180 = memref.load %arg2[%c46] : memref<144xf32, #tpu.memory_space<smem>>
    %181 = vector.broadcast %180 : f32 to vector<16x16xf32>
    %182 = arith.mulf %181, %175 : vector<16x16xf32>
    %183 = arith.addf %166, %182 : vector<16x16xf32>
    %c82 = arith.constant 82 : index
    %184 = memref.load %arg2[%c82] : memref<144xf32, #tpu.memory_space<smem>>
    %185 = vector.broadcast %184 : f32 to vector<16x16xf32>
    %186 = arith.mulf %185, %175 : vector<16x16xf32>
    %187 = arith.addf %170, %186 : vector<16x16xf32>
    %c118 = arith.constant 118 : index
    %188 = memref.load %arg2[%c118] : memref<144xf32, #tpu.memory_space<smem>>
    %189 = vector.broadcast %188 : f32 to vector<16x16xf32>
    %190 = arith.mulf %189, %175 : vector<16x16xf32>
    %191 = arith.addf %174, %190 : vector<16x16xf32>
    %192 = vector.extract_strided_slice %157 {offsets = [0, 2], sizes = [16, 16], strides = [1, 1]} : vector<18x18xf32> to vector<16x16xf32>
    %c11 = arith.constant 11 : index
    %193 = memref.load %arg2[%c11] : memref<144xf32, #tpu.memory_space<smem>>
    %194 = vector.broadcast %193 : f32 to vector<16x16xf32>
    %195 = arith.mulf %194, %192 : vector<16x16xf32>
    %196 = arith.addf %179, %195 : vector<16x16xf32>
    %c47 = arith.constant 47 : index
    %197 = memref.load %arg2[%c47] : memref<144xf32, #tpu.memory_space<smem>>
    %198 = vector.broadcast %197 : f32 to vector<16x16xf32>
    %199 = arith.mulf %198, %192 : vector<16x16xf32>
    %200 = arith.addf %183, %199 : vector<16x16xf32>
    %c83 = arith.constant 83 : index
    %201 = memref.load %arg2[%c83] : memref<144xf32, #tpu.memory_space<smem>>
    %202 = vector.broadcast %201 : f32 to vector<16x16xf32>
    %203 = arith.mulf %202, %192 : vector<16x16xf32>
    %204 = arith.addf %187, %203 : vector<16x16xf32>
    %c119 = arith.constant 119 : index
    %205 = memref.load %arg2[%c119] : memref<144xf32, #tpu.memory_space<smem>>
    %206 = vector.broadcast %205 : f32 to vector<16x16xf32>
    %207 = arith.mulf %206, %192 : vector<16x16xf32>
    %208 = arith.addf %191, %207 : vector<16x16xf32>
    %209 = vector.extract_strided_slice %157 {offsets = [1, 0], sizes = [16, 16], strides = [1, 1]} : vector<18x18xf32> to vector<16x16xf32>
    %c12 = arith.constant 12 : index
    %210 = memref.load %arg2[%c12] : memref<144xf32, #tpu.memory_space<smem>>
    %211 = vector.broadcast %210 : f32 to vector<16x16xf32>
    %212 = arith.mulf %211, %209 : vector<16x16xf32>
    %213 = arith.addf %196, %212 : vector<16x16xf32>
    %c48 = arith.constant 48 : index
    %214 = memref.load %arg2[%c48] : memref<144xf32, #tpu.memory_space<smem>>
    %215 = vector.broadcast %214 : f32 to vector<16x16xf32>
    %216 = arith.mulf %215, %209 : vector<16x16xf32>
    %217 = arith.addf %200, %216 : vector<16x16xf32>
    %c84 = arith.constant 84 : index
    %218 = memref.load %arg2[%c84] : memref<144xf32, #tpu.memory_space<smem>>
    %219 = vector.broadcast %218 : f32 to vector<16x16xf32>
    %220 = arith.mulf %219, %209 : vector<16x16xf32>
    %221 = arith.addf %204, %220 : vector<16x16xf32>
    %c120 = arith.constant 120 : index
    %222 = memref.load %arg2[%c120] : memref<144xf32, #tpu.memory_space<smem>>
    %223 = vector.broadcast %222 : f32 to vector<16x16xf32>
    %224 = arith.mulf %223, %209 : vector<16x16xf32>
    %225 = arith.addf %208, %224 : vector<16x16xf32>
    %226 = vector.extract_strided_slice %157 {offsets = [1, 1], sizes = [16, 16], strides = [1, 1]} : vector<18x18xf32> to vector<16x16xf32>
    %c13 = arith.constant 13 : index
    %227 = memref.load %arg2[%c13] : memref<144xf32, #tpu.memory_space<smem>>
    %228 = vector.broadcast %227 : f32 to vector<16x16xf32>
    %229 = arith.mulf %228, %226 : vector<16x16xf32>
    %230 = arith.addf %213, %229 : vector<16x16xf32>
    %c49 = arith.constant 49 : index
    %231 = memref.load %arg2[%c49] : memref<144xf32, #tpu.memory_space<smem>>
    %232 = vector.broadcast %231 : f32 to vector<16x16xf32>
    %233 = arith.mulf %232, %226 : vector<16x16xf32>
    %234 = arith.addf %217, %233 : vector<16x16xf32>
    %c85 = arith.constant 85 : index
    %235 = memref.load %arg2[%c85] : memref<144xf32, #tpu.memory_space<smem>>
    %236 = vector.broadcast %235 : f32 to vector<16x16xf32>
    %237 = arith.mulf %236, %226 : vector<16x16xf32>
    %238 = arith.addf %221, %237 : vector<16x16xf32>
    %c121 = arith.constant 121 : index
    %239 = memref.load %arg2[%c121] : memref<144xf32, #tpu.memory_space<smem>>
    %240 = vector.broadcast %239 : f32 to vector<16x16xf32>
    %241 = arith.mulf %240, %226 : vector<16x16xf32>
    %242 = arith.addf %225, %241 : vector<16x16xf32>
    %243 = vector.extract_strided_slice %157 {offsets = [1, 2], sizes = [16, 16], strides = [1, 1]} : vector<18x18xf32> to vector<16x16xf32>
    %c14 = arith.constant 14 : index
    %244 = memref.load %arg2[%c14] : memref<144xf32, #tpu.memory_space<smem>>
    %245 = vector.broadcast %244 : f32 to vector<16x16xf32>
    %246 = arith.mulf %245, %243 : vector<16x16xf32>
    %247 = arith.addf %230, %246 : vector<16x16xf32>
    %c50 = arith.constant 50 : index
    %248 = memref.load %arg2[%c50] : memref<144xf32, #tpu.memory_space<smem>>
    %249 = vector.broadcast %248 : f32 to vector<16x16xf32>
    %250 = arith.mulf %249, %243 : vector<16x16xf32>
    %251 = arith.addf %234, %250 : vector<16x16xf32>
    %c86 = arith.constant 86 : index
    %252 = memref.load %arg2[%c86] : memref<144xf32, #tpu.memory_space<smem>>
    %253 = vector.broadcast %252 : f32 to vector<16x16xf32>
    %254 = arith.mulf %253, %243 : vector<16x16xf32>
    %255 = arith.addf %238, %254 : vector<16x16xf32>
    %c122 = arith.constant 122 : index
    %256 = memref.load %arg2[%c122] : memref<144xf32, #tpu.memory_space<smem>>
    %257 = vector.broadcast %256 : f32 to vector<16x16xf32>
    %258 = arith.mulf %257, %243 : vector<16x16xf32>
    %259 = arith.addf %242, %258 : vector<16x16xf32>
    %260 = vector.extract_strided_slice %157 {offsets = [2, 0], sizes = [16, 16], strides = [1, 1]} : vector<18x18xf32> to vector<16x16xf32>
    %c15 = arith.constant 15 : index
    %261 = memref.load %arg2[%c15] : memref<144xf32, #tpu.memory_space<smem>>
    %262 = vector.broadcast %261 : f32 to vector<16x16xf32>
    %263 = arith.mulf %262, %260 : vector<16x16xf32>
    %264 = arith.addf %247, %263 : vector<16x16xf32>
    %c51 = arith.constant 51 : index
    %265 = memref.load %arg2[%c51] : memref<144xf32, #tpu.memory_space<smem>>
    %266 = vector.broadcast %265 : f32 to vector<16x16xf32>
    %267 = arith.mulf %266, %260 : vector<16x16xf32>
    %268 = arith.addf %251, %267 : vector<16x16xf32>
    %c87 = arith.constant 87 : index
    %269 = memref.load %arg2[%c87] : memref<144xf32, #tpu.memory_space<smem>>
    %270 = vector.broadcast %269 : f32 to vector<16x16xf32>
    %271 = arith.mulf %270, %260 : vector<16x16xf32>
    %272 = arith.addf %255, %271 : vector<16x16xf32>
    %c123 = arith.constant 123 : index
    %273 = memref.load %arg2[%c123] : memref<144xf32, #tpu.memory_space<smem>>
    %274 = vector.broadcast %273 : f32 to vector<16x16xf32>
    %275 = arith.mulf %274, %260 : vector<16x16xf32>
    %276 = arith.addf %259, %275 : vector<16x16xf32>
    %277 = vector.extract_strided_slice %157 {offsets = [2, 1], sizes = [16, 16], strides = [1, 1]} : vector<18x18xf32> to vector<16x16xf32>
    %c16 = arith.constant 16 : index
    %278 = memref.load %arg2[%c16] : memref<144xf32, #tpu.memory_space<smem>>
    %279 = vector.broadcast %278 : f32 to vector<16x16xf32>
    %280 = arith.mulf %279, %277 : vector<16x16xf32>
    %281 = arith.addf %264, %280 : vector<16x16xf32>
    %c52 = arith.constant 52 : index
    %282 = memref.load %arg2[%c52] : memref<144xf32, #tpu.memory_space<smem>>
    %283 = vector.broadcast %282 : f32 to vector<16x16xf32>
    %284 = arith.mulf %283, %277 : vector<16x16xf32>
    %285 = arith.addf %268, %284 : vector<16x16xf32>
    %c88 = arith.constant 88 : index
    %286 = memref.load %arg2[%c88] : memref<144xf32, #tpu.memory_space<smem>>
    %287 = vector.broadcast %286 : f32 to vector<16x16xf32>
    %288 = arith.mulf %287, %277 : vector<16x16xf32>
    %289 = arith.addf %272, %288 : vector<16x16xf32>
    %c124 = arith.constant 124 : index
    %290 = memref.load %arg2[%c124] : memref<144xf32, #tpu.memory_space<smem>>
    %291 = vector.broadcast %290 : f32 to vector<16x16xf32>
    %292 = arith.mulf %291, %277 : vector<16x16xf32>
    %293 = arith.addf %276, %292 : vector<16x16xf32>
    %294 = vector.extract_strided_slice %157 {offsets = [2, 2], sizes = [16, 16], strides = [1, 1]} : vector<18x18xf32> to vector<16x16xf32>
    %c17 = arith.constant 17 : index
    %295 = memref.load %arg2[%c17] : memref<144xf32, #tpu.memory_space<smem>>
    %296 = vector.broadcast %295 : f32 to vector<16x16xf32>
    %297 = arith.mulf %296, %294 : vector<16x16xf32>
    %298 = arith.addf %281, %297 : vector<16x16xf32>
    %c53 = arith.constant 53 : index
    %299 = memref.load %arg2[%c53] : memref<144xf32, #tpu.memory_space<smem>>
    %300 = vector.broadcast %299 : f32 to vector<16x16xf32>
    %301 = arith.mulf %300, %294 : vector<16x16xf32>
    %302 = arith.addf %285, %301 : vector<16x16xf32>
    %c89 = arith.constant 89 : index
    %303 = memref.load %arg2[%c89] : memref<144xf32, #tpu.memory_space<smem>>
    %304 = vector.broadcast %303 : f32 to vector<16x16xf32>
    %305 = arith.mulf %304, %294 : vector<16x16xf32>
    %306 = arith.addf %289, %305 : vector<16x16xf32>
    %c125 = arith.constant 125 : index
    %307 = memref.load %arg2[%c125] : memref<144xf32, #tpu.memory_space<smem>>
    %308 = vector.broadcast %307 : f32 to vector<16x16xf32>
    %309 = arith.mulf %308, %294 : vector<16x16xf32>
    %310 = arith.addf %293, %309 : vector<16x16xf32>
    %c2_16 = arith.constant 2 : index
    %c0_17 = arith.constant 0 : index
    %c0_18 = arith.constant 0 : index
    %311 = vector.load %arg5[%c2_16, %c0_17, %c0_18] : memref<4x18x18xf32, #tpu.memory_space<vmem>>, vector<1x18x18xf32>
    %312 = vector.shape_cast %311 : vector<1x18x18xf32> to vector<18x18xf32>
    %313 = vector.extract_strided_slice %312 {offsets = [0, 0], sizes = [16, 16], strides = [1, 1]} : vector<18x18xf32> to vector<16x16xf32>
    %c18 = arith.constant 18 : index
    %314 = memref.load %arg2[%c18] : memref<144xf32, #tpu.memory_space<smem>>
    %315 = vector.broadcast %314 : f32 to vector<16x16xf32>
    %316 = arith.mulf %315, %313 : vector<16x16xf32>
    %317 = arith.addf %298, %316 : vector<16x16xf32>
    %c54 = arith.constant 54 : index
    %318 = memref.load %arg2[%c54] : memref<144xf32, #tpu.memory_space<smem>>
    %319 = vector.broadcast %318 : f32 to vector<16x16xf32>
    %320 = arith.mulf %319, %313 : vector<16x16xf32>
    %321 = arith.addf %302, %320 : vector<16x16xf32>
    %c90 = arith.constant 90 : index
    %322 = memref.load %arg2[%c90] : memref<144xf32, #tpu.memory_space<smem>>
    %323 = vector.broadcast %322 : f32 to vector<16x16xf32>
    %324 = arith.mulf %323, %313 : vector<16x16xf32>
    %325 = arith.addf %306, %324 : vector<16x16xf32>
    %c126 = arith.constant 126 : index
    %326 = memref.load %arg2[%c126] : memref<144xf32, #tpu.memory_space<smem>>
    %327 = vector.broadcast %326 : f32 to vector<16x16xf32>
    %328 = arith.mulf %327, %313 : vector<16x16xf32>
    %329 = arith.addf %310, %328 : vector<16x16xf32>
    %330 = vector.extract_strided_slice %312 {offsets = [0, 1], sizes = [16, 16], strides = [1, 1]} : vector<18x18xf32> to vector<16x16xf32>
    %c19 = arith.constant 19 : index
    %331 = memref.load %arg2[%c19] : memref<144xf32, #tpu.memory_space<smem>>
    %332 = vector.broadcast %331 : f32 to vector<16x16xf32>
    %333 = arith.mulf %332, %330 : vector<16x16xf32>
    %334 = arith.addf %317, %333 : vector<16x16xf32>
    %c55 = arith.constant 55 : index
    %335 = memref.load %arg2[%c55] : memref<144xf32, #tpu.memory_space<smem>>
    %336 = vector.broadcast %335 : f32 to vector<16x16xf32>
    %337 = arith.mulf %336, %330 : vector<16x16xf32>
    %338 = arith.addf %321, %337 : vector<16x16xf32>
    %c91 = arith.constant 91 : index
    %339 = memref.load %arg2[%c91] : memref<144xf32, #tpu.memory_space<smem>>
    %340 = vector.broadcast %339 : f32 to vector<16x16xf32>
    %341 = arith.mulf %340, %330 : vector<16x16xf32>
    %342 = arith.addf %325, %341 : vector<16x16xf32>
    %c127 = arith.constant 127 : index
    %343 = memref.load %arg2[%c127] : memref<144xf32, #tpu.memory_space<smem>>
    %344 = vector.broadcast %343 : f32 to vector<16x16xf32>
    %345 = arith.mulf %344, %330 : vector<16x16xf32>
    %346 = arith.addf %329, %345 : vector<16x16xf32>
    %347 = vector.extract_strided_slice %312 {offsets = [0, 2], sizes = [16, 16], strides = [1, 1]} : vector<18x18xf32> to vector<16x16xf32>
    %c20 = arith.constant 20 : index
    %348 = memref.load %arg2[%c20] : memref<144xf32, #tpu.memory_space<smem>>
    %349 = vector.broadcast %348 : f32 to vector<16x16xf32>
    %350 = arith.mulf %349, %347 : vector<16x16xf32>
    %351 = arith.addf %334, %350 : vector<16x16xf32>
    %c56 = arith.constant 56 : index
    %352 = memref.load %arg2[%c56] : memref<144xf32, #tpu.memory_space<smem>>
    %353 = vector.broadcast %352 : f32 to vector<16x16xf32>
    %354 = arith.mulf %353, %347 : vector<16x16xf32>
    %355 = arith.addf %338, %354 : vector<16x16xf32>
    %c92 = arith.constant 92 : index
    %356 = memref.load %arg2[%c92] : memref<144xf32, #tpu.memory_space<smem>>
    %357 = vector.broadcast %356 : f32 to vector<16x16xf32>
    %358 = arith.mulf %357, %347 : vector<16x16xf32>
    %359 = arith.addf %342, %358 : vector<16x16xf32>
    %c128 = arith.constant 128 : index
    %360 = memref.load %arg2[%c128] : memref<144xf32, #tpu.memory_space<smem>>
    %361 = vector.broadcast %360 : f32 to vector<16x16xf32>
    %362 = arith.mulf %361, %347 : vector<16x16xf32>
    %363 = arith.addf %346, %362 : vector<16x16xf32>
    %364 = vector.extract_strided_slice %312 {offsets = [1, 0], sizes = [16, 16], strides = [1, 1]} : vector<18x18xf32> to vector<16x16xf32>
    %c21 = arith.constant 21 : index
    %365 = memref.load %arg2[%c21] : memref<144xf32, #tpu.memory_space<smem>>
    %366 = vector.broadcast %365 : f32 to vector<16x16xf32>
    %367 = arith.mulf %366, %364 : vector<16x16xf32>
    %368 = arith.addf %351, %367 : vector<16x16xf32>
    %c57 = arith.constant 57 : index
    %369 = memref.load %arg2[%c57] : memref<144xf32, #tpu.memory_space<smem>>
    %370 = vector.broadcast %369 : f32 to vector<16x16xf32>
    %371 = arith.mulf %370, %364 : vector<16x16xf32>
    %372 = arith.addf %355, %371 : vector<16x16xf32>
    %c93 = arith.constant 93 : index
    %373 = memref.load %arg2[%c93] : memref<144xf32, #tpu.memory_space<smem>>
    %374 = vector.broadcast %373 : f32 to vector<16x16xf32>
    %375 = arith.mulf %374, %364 : vector<16x16xf32>
    %376 = arith.addf %359, %375 : vector<16x16xf32>
    %c129 = arith.constant 129 : index
    %377 = memref.load %arg2[%c129] : memref<144xf32, #tpu.memory_space<smem>>
    %378 = vector.broadcast %377 : f32 to vector<16x16xf32>
    %379 = arith.mulf %378, %364 : vector<16x16xf32>
    %380 = arith.addf %363, %379 : vector<16x16xf32>
    %381 = vector.extract_strided_slice %312 {offsets = [1, 1], sizes = [16, 16], strides = [1, 1]} : vector<18x18xf32> to vector<16x16xf32>
    %c22 = arith.constant 22 : index
    %382 = memref.load %arg2[%c22] : memref<144xf32, #tpu.memory_space<smem>>
    %383 = vector.broadcast %382 : f32 to vector<16x16xf32>
    %384 = arith.mulf %383, %381 : vector<16x16xf32>
    %385 = arith.addf %368, %384 : vector<16x16xf32>
    %c58 = arith.constant 58 : index
    %386 = memref.load %arg2[%c58] : memref<144xf32, #tpu.memory_space<smem>>
    %387 = vector.broadcast %386 : f32 to vector<16x16xf32>
    %388 = arith.mulf %387, %381 : vector<16x16xf32>
    %389 = arith.addf %372, %388 : vector<16x16xf32>
    %c94 = arith.constant 94 : index
    %390 = memref.load %arg2[%c94] : memref<144xf32, #tpu.memory_space<smem>>
    %391 = vector.broadcast %390 : f32 to vector<16x16xf32>
    %392 = arith.mulf %391, %381 : vector<16x16xf32>
    %393 = arith.addf %376, %392 : vector<16x16xf32>
    %c130 = arith.constant 130 : index
    %394 = memref.load %arg2[%c130] : memref<144xf32, #tpu.memory_space<smem>>
    %395 = vector.broadcast %394 : f32 to vector<16x16xf32>
    %396 = arith.mulf %395, %381 : vector<16x16xf32>
    %397 = arith.addf %380, %396 : vector<16x16xf32>
    %398 = vector.extract_strided_slice %312 {offsets = [1, 2], sizes = [16, 16], strides = [1, 1]} : vector<18x18xf32> to vector<16x16xf32>
    %c23 = arith.constant 23 : index
    %399 = memref.load %arg2[%c23] : memref<144xf32, #tpu.memory_space<smem>>
    %400 = vector.broadcast %399 : f32 to vector<16x16xf32>
    %401 = arith.mulf %400, %398 : vector<16x16xf32>
    %402 = arith.addf %385, %401 : vector<16x16xf32>
    %c59 = arith.constant 59 : index
    %403 = memref.load %arg2[%c59] : memref<144xf32, #tpu.memory_space<smem>>
    %404 = vector.broadcast %403 : f32 to vector<16x16xf32>
    %405 = arith.mulf %404, %398 : vector<16x16xf32>
    %406 = arith.addf %389, %405 : vector<16x16xf32>
    %c95 = arith.constant 95 : index
    %407 = memref.load %arg2[%c95] : memref<144xf32, #tpu.memory_space<smem>>
    %408 = vector.broadcast %407 : f32 to vector<16x16xf32>
    %409 = arith.mulf %408, %398 : vector<16x16xf32>
    %410 = arith.addf %393, %409 : vector<16x16xf32>
    %c131 = arith.constant 131 : index
    %411 = memref.load %arg2[%c131] : memref<144xf32, #tpu.memory_space<smem>>
    %412 = vector.broadcast %411 : f32 to vector<16x16xf32>
    %413 = arith.mulf %412, %398 : vector<16x16xf32>
    %414 = arith.addf %397, %413 : vector<16x16xf32>
    %415 = vector.extract_strided_slice %312 {offsets = [2, 0], sizes = [16, 16], strides = [1, 1]} : vector<18x18xf32> to vector<16x16xf32>
    %c24 = arith.constant 24 : index
    %416 = memref.load %arg2[%c24] : memref<144xf32, #tpu.memory_space<smem>>
    %417 = vector.broadcast %416 : f32 to vector<16x16xf32>
    %418 = arith.mulf %417, %415 : vector<16x16xf32>
    %419 = arith.addf %402, %418 : vector<16x16xf32>
    %c60 = arith.constant 60 : index
    %420 = memref.load %arg2[%c60] : memref<144xf32, #tpu.memory_space<smem>>
    %421 = vector.broadcast %420 : f32 to vector<16x16xf32>
    %422 = arith.mulf %421, %415 : vector<16x16xf32>
    %423 = arith.addf %406, %422 : vector<16x16xf32>
    %c96 = arith.constant 96 : index
    %424 = memref.load %arg2[%c96] : memref<144xf32, #tpu.memory_space<smem>>
    %425 = vector.broadcast %424 : f32 to vector<16x16xf32>
    %426 = arith.mulf %425, %415 : vector<16x16xf32>
    %427 = arith.addf %410, %426 : vector<16x16xf32>
    %c132 = arith.constant 132 : index
    %428 = memref.load %arg2[%c132] : memref<144xf32, #tpu.memory_space<smem>>
    %429 = vector.broadcast %428 : f32 to vector<16x16xf32>
    %430 = arith.mulf %429, %415 : vector<16x16xf32>
    %431 = arith.addf %414, %430 : vector<16x16xf32>
    %432 = vector.extract_strided_slice %312 {offsets = [2, 1], sizes = [16, 16], strides = [1, 1]} : vector<18x18xf32> to vector<16x16xf32>
    %c25 = arith.constant 25 : index
    %433 = memref.load %arg2[%c25] : memref<144xf32, #tpu.memory_space<smem>>
    %434 = vector.broadcast %433 : f32 to vector<16x16xf32>
    %435 = arith.mulf %434, %432 : vector<16x16xf32>
    %436 = arith.addf %419, %435 : vector<16x16xf32>
    %c61 = arith.constant 61 : index
    %437 = memref.load %arg2[%c61] : memref<144xf32, #tpu.memory_space<smem>>
    %438 = vector.broadcast %437 : f32 to vector<16x16xf32>
    %439 = arith.mulf %438, %432 : vector<16x16xf32>
    %440 = arith.addf %423, %439 : vector<16x16xf32>
    %c97 = arith.constant 97 : index
    %441 = memref.load %arg2[%c97] : memref<144xf32, #tpu.memory_space<smem>>
    %442 = vector.broadcast %441 : f32 to vector<16x16xf32>
    %443 = arith.mulf %442, %432 : vector<16x16xf32>
    %444 = arith.addf %427, %443 : vector<16x16xf32>
    %c133 = arith.constant 133 : index
    %445 = memref.load %arg2[%c133] : memref<144xf32, #tpu.memory_space<smem>>
    %446 = vector.broadcast %445 : f32 to vector<16x16xf32>
    %447 = arith.mulf %446, %432 : vector<16x16xf32>
    %448 = arith.addf %431, %447 : vector<16x16xf32>
    %449 = vector.extract_strided_slice %312 {offsets = [2, 2], sizes = [16, 16], strides = [1, 1]} : vector<18x18xf32> to vector<16x16xf32>
    %c26 = arith.constant 26 : index
    %450 = memref.load %arg2[%c26] : memref<144xf32, #tpu.memory_space<smem>>
    %451 = vector.broadcast %450 : f32 to vector<16x16xf32>
    %452 = arith.mulf %451, %449 : vector<16x16xf32>
    %453 = arith.addf %436, %452 : vector<16x16xf32>
    %c62 = arith.constant 62 : index
    %454 = memref.load %arg2[%c62] : memref<144xf32, #tpu.memory_space<smem>>
    %455 = vector.broadcast %454 : f32 to vector<16x16xf32>
    %456 = arith.mulf %455, %449 : vector<16x16xf32>
    %457 = arith.addf %440, %456 : vector<16x16xf32>
    %c98 = arith.constant 98 : index
    %458 = memref.load %arg2[%c98] : memref<144xf32, #tpu.memory_space<smem>>
    %459 = vector.broadcast %458 : f32 to vector<16x16xf32>
    %460 = arith.mulf %459, %449 : vector<16x16xf32>
    %461 = arith.addf %444, %460 : vector<16x16xf32>
    %c134 = arith.constant 134 : index
    %462 = memref.load %arg2[%c134] : memref<144xf32, #tpu.memory_space<smem>>
    %463 = vector.broadcast %462 : f32 to vector<16x16xf32>
    %464 = arith.mulf %463, %449 : vector<16x16xf32>
    %465 = arith.addf %448, %464 : vector<16x16xf32>
    %c3_19 = arith.constant 3 : index
    %c0_20 = arith.constant 0 : index
    %c0_21 = arith.constant 0 : index
    %466 = vector.load %arg5[%c3_19, %c0_20, %c0_21] : memref<4x18x18xf32, #tpu.memory_space<vmem>>, vector<1x18x18xf32>
    %467 = vector.shape_cast %466 : vector<1x18x18xf32> to vector<18x18xf32>
    %468 = vector.extract_strided_slice %467 {offsets = [0, 0], sizes = [16, 16], strides = [1, 1]} : vector<18x18xf32> to vector<16x16xf32>
    %c27 = arith.constant 27 : index
    %469 = memref.load %arg2[%c27] : memref<144xf32, #tpu.memory_space<smem>>
    %470 = vector.broadcast %469 : f32 to vector<16x16xf32>
    %471 = arith.mulf %470, %468 : vector<16x16xf32>
    %472 = arith.addf %453, %471 : vector<16x16xf32>
    %c63 = arith.constant 63 : index
    %473 = memref.load %arg2[%c63] : memref<144xf32, #tpu.memory_space<smem>>
    %474 = vector.broadcast %473 : f32 to vector<16x16xf32>
    %475 = arith.mulf %474, %468 : vector<16x16xf32>
    %476 = arith.addf %457, %475 : vector<16x16xf32>
    %c99 = arith.constant 99 : index
    %477 = memref.load %arg2[%c99] : memref<144xf32, #tpu.memory_space<smem>>
    %478 = vector.broadcast %477 : f32 to vector<16x16xf32>
    %479 = arith.mulf %478, %468 : vector<16x16xf32>
    %480 = arith.addf %461, %479 : vector<16x16xf32>
    %c135 = arith.constant 135 : index
    %481 = memref.load %arg2[%c135] : memref<144xf32, #tpu.memory_space<smem>>
    %482 = vector.broadcast %481 : f32 to vector<16x16xf32>
    %483 = arith.mulf %482, %468 : vector<16x16xf32>
    %484 = arith.addf %465, %483 : vector<16x16xf32>
    %485 = vector.extract_strided_slice %467 {offsets = [0, 1], sizes = [16, 16], strides = [1, 1]} : vector<18x18xf32> to vector<16x16xf32>
    %c28 = arith.constant 28 : index
    %486 = memref.load %arg2[%c28] : memref<144xf32, #tpu.memory_space<smem>>
    %487 = vector.broadcast %486 : f32 to vector<16x16xf32>
    %488 = arith.mulf %487, %485 : vector<16x16xf32>
    %489 = arith.addf %472, %488 : vector<16x16xf32>
    %c64 = arith.constant 64 : index
    %490 = memref.load %arg2[%c64] : memref<144xf32, #tpu.memory_space<smem>>
    %491 = vector.broadcast %490 : f32 to vector<16x16xf32>
    %492 = arith.mulf %491, %485 : vector<16x16xf32>
    %493 = arith.addf %476, %492 : vector<16x16xf32>
    %c100 = arith.constant 100 : index
    %494 = memref.load %arg2[%c100] : memref<144xf32, #tpu.memory_space<smem>>
    %495 = vector.broadcast %494 : f32 to vector<16x16xf32>
    %496 = arith.mulf %495, %485 : vector<16x16xf32>
    %497 = arith.addf %480, %496 : vector<16x16xf32>
    %c136 = arith.constant 136 : index
    %498 = memref.load %arg2[%c136] : memref<144xf32, #tpu.memory_space<smem>>
    %499 = vector.broadcast %498 : f32 to vector<16x16xf32>
    %500 = arith.mulf %499, %485 : vector<16x16xf32>
    %501 = arith.addf %484, %500 : vector<16x16xf32>
    %502 = vector.extract_strided_slice %467 {offsets = [0, 2], sizes = [16, 16], strides = [1, 1]} : vector<18x18xf32> to vector<16x16xf32>
    %c29 = arith.constant 29 : index
    %503 = memref.load %arg2[%c29] : memref<144xf32, #tpu.memory_space<smem>>
    %504 = vector.broadcast %503 : f32 to vector<16x16xf32>
    %505 = arith.mulf %504, %502 : vector<16x16xf32>
    %506 = arith.addf %489, %505 : vector<16x16xf32>
    %c65 = arith.constant 65 : index
    %507 = memref.load %arg2[%c65] : memref<144xf32, #tpu.memory_space<smem>>
    %508 = vector.broadcast %507 : f32 to vector<16x16xf32>
    %509 = arith.mulf %508, %502 : vector<16x16xf32>
    %510 = arith.addf %493, %509 : vector<16x16xf32>
    %c101 = arith.constant 101 : index
    %511 = memref.load %arg2[%c101] : memref<144xf32, #tpu.memory_space<smem>>
    %512 = vector.broadcast %511 : f32 to vector<16x16xf32>
    %513 = arith.mulf %512, %502 : vector<16x16xf32>
    %514 = arith.addf %497, %513 : vector<16x16xf32>
    %c137 = arith.constant 137 : index
    %515 = memref.load %arg2[%c137] : memref<144xf32, #tpu.memory_space<smem>>
    %516 = vector.broadcast %515 : f32 to vector<16x16xf32>
    %517 = arith.mulf %516, %502 : vector<16x16xf32>
    %518 = arith.addf %501, %517 : vector<16x16xf32>
    %519 = vector.extract_strided_slice %467 {offsets = [1, 0], sizes = [16, 16], strides = [1, 1]} : vector<18x18xf32> to vector<16x16xf32>
    %c30 = arith.constant 30 : index
    %520 = memref.load %arg2[%c30] : memref<144xf32, #tpu.memory_space<smem>>
    %521 = vector.broadcast %520 : f32 to vector<16x16xf32>
    %522 = arith.mulf %521, %519 : vector<16x16xf32>
    %523 = arith.addf %506, %522 : vector<16x16xf32>
    %c66 = arith.constant 66 : index
    %524 = memref.load %arg2[%c66] : memref<144xf32, #tpu.memory_space<smem>>
    %525 = vector.broadcast %524 : f32 to vector<16x16xf32>
    %526 = arith.mulf %525, %519 : vector<16x16xf32>
    %527 = arith.addf %510, %526 : vector<16x16xf32>
    %c102 = arith.constant 102 : index
    %528 = memref.load %arg2[%c102] : memref<144xf32, #tpu.memory_space<smem>>
    %529 = vector.broadcast %528 : f32 to vector<16x16xf32>
    %530 = arith.mulf %529, %519 : vector<16x16xf32>
    %531 = arith.addf %514, %530 : vector<16x16xf32>
    %c138 = arith.constant 138 : index
    %532 = memref.load %arg2[%c138] : memref<144xf32, #tpu.memory_space<smem>>
    %533 = vector.broadcast %532 : f32 to vector<16x16xf32>
    %534 = arith.mulf %533, %519 : vector<16x16xf32>
    %535 = arith.addf %518, %534 : vector<16x16xf32>
    %536 = vector.extract_strided_slice %467 {offsets = [1, 1], sizes = [16, 16], strides = [1, 1]} : vector<18x18xf32> to vector<16x16xf32>
    %c31 = arith.constant 31 : index
    %537 = memref.load %arg2[%c31] : memref<144xf32, #tpu.memory_space<smem>>
    %538 = vector.broadcast %537 : f32 to vector<16x16xf32>
    %539 = arith.mulf %538, %536 : vector<16x16xf32>
    %540 = arith.addf %523, %539 : vector<16x16xf32>
    %c67 = arith.constant 67 : index
    %541 = memref.load %arg2[%c67] : memref<144xf32, #tpu.memory_space<smem>>
    %542 = vector.broadcast %541 : f32 to vector<16x16xf32>
    %543 = arith.mulf %542, %536 : vector<16x16xf32>
    %544 = arith.addf %527, %543 : vector<16x16xf32>
    %c103 = arith.constant 103 : index
    %545 = memref.load %arg2[%c103] : memref<144xf32, #tpu.memory_space<smem>>
    %546 = vector.broadcast %545 : f32 to vector<16x16xf32>
    %547 = arith.mulf %546, %536 : vector<16x16xf32>
    %548 = arith.addf %531, %547 : vector<16x16xf32>
    %c139 = arith.constant 139 : index
    %549 = memref.load %arg2[%c139] : memref<144xf32, #tpu.memory_space<smem>>
    %550 = vector.broadcast %549 : f32 to vector<16x16xf32>
    %551 = arith.mulf %550, %536 : vector<16x16xf32>
    %552 = arith.addf %535, %551 : vector<16x16xf32>
    %553 = vector.extract_strided_slice %467 {offsets = [1, 2], sizes = [16, 16], strides = [1, 1]} : vector<18x18xf32> to vector<16x16xf32>
    %c32 = arith.constant 32 : index
    %554 = memref.load %arg2[%c32] : memref<144xf32, #tpu.memory_space<smem>>
    %555 = vector.broadcast %554 : f32 to vector<16x16xf32>
    %556 = arith.mulf %555, %553 : vector<16x16xf32>
    %557 = arith.addf %540, %556 : vector<16x16xf32>
    %c68 = arith.constant 68 : index
    %558 = memref.load %arg2[%c68] : memref<144xf32, #tpu.memory_space<smem>>
    %559 = vector.broadcast %558 : f32 to vector<16x16xf32>
    %560 = arith.mulf %559, %553 : vector<16x16xf32>
    %561 = arith.addf %544, %560 : vector<16x16xf32>
    %c104 = arith.constant 104 : index
    %562 = memref.load %arg2[%c104] : memref<144xf32, #tpu.memory_space<smem>>
    %563 = vector.broadcast %562 : f32 to vector<16x16xf32>
    %564 = arith.mulf %563, %553 : vector<16x16xf32>
    %565 = arith.addf %548, %564 : vector<16x16xf32>
    %c140 = arith.constant 140 : index
    %566 = memref.load %arg2[%c140] : memref<144xf32, #tpu.memory_space<smem>>
    %567 = vector.broadcast %566 : f32 to vector<16x16xf32>
    %568 = arith.mulf %567, %553 : vector<16x16xf32>
    %569 = arith.addf %552, %568 : vector<16x16xf32>
    %570 = vector.extract_strided_slice %467 {offsets = [2, 0], sizes = [16, 16], strides = [1, 1]} : vector<18x18xf32> to vector<16x16xf32>
    %c33 = arith.constant 33 : index
    %571 = memref.load %arg2[%c33] : memref<144xf32, #tpu.memory_space<smem>>
    %572 = vector.broadcast %571 : f32 to vector<16x16xf32>
    %573 = arith.mulf %572, %570 : vector<16x16xf32>
    %574 = arith.addf %557, %573 : vector<16x16xf32>
    %c69 = arith.constant 69 : index
    %575 = memref.load %arg2[%c69] : memref<144xf32, #tpu.memory_space<smem>>
    %576 = vector.broadcast %575 : f32 to vector<16x16xf32>
    %577 = arith.mulf %576, %570 : vector<16x16xf32>
    %578 = arith.addf %561, %577 : vector<16x16xf32>
    %c105 = arith.constant 105 : index
    %579 = memref.load %arg2[%c105] : memref<144xf32, #tpu.memory_space<smem>>
    %580 = vector.broadcast %579 : f32 to vector<16x16xf32>
    %581 = arith.mulf %580, %570 : vector<16x16xf32>
    %582 = arith.addf %565, %581 : vector<16x16xf32>
    %c141 = arith.constant 141 : index
    %583 = memref.load %arg2[%c141] : memref<144xf32, #tpu.memory_space<smem>>
    %584 = vector.broadcast %583 : f32 to vector<16x16xf32>
    %585 = arith.mulf %584, %570 : vector<16x16xf32>
    %586 = arith.addf %569, %585 : vector<16x16xf32>
    %587 = vector.extract_strided_slice %467 {offsets = [2, 1], sizes = [16, 16], strides = [1, 1]} : vector<18x18xf32> to vector<16x16xf32>
    %c34 = arith.constant 34 : index
    %588 = memref.load %arg2[%c34] : memref<144xf32, #tpu.memory_space<smem>>
    %589 = vector.broadcast %588 : f32 to vector<16x16xf32>
    %590 = arith.mulf %589, %587 : vector<16x16xf32>
    %591 = arith.addf %574, %590 : vector<16x16xf32>
    %c70 = arith.constant 70 : index
    %592 = memref.load %arg2[%c70] : memref<144xf32, #tpu.memory_space<smem>>
    %593 = vector.broadcast %592 : f32 to vector<16x16xf32>
    %594 = arith.mulf %593, %587 : vector<16x16xf32>
    %595 = arith.addf %578, %594 : vector<16x16xf32>
    %c106 = arith.constant 106 : index
    %596 = memref.load %arg2[%c106] : memref<144xf32, #tpu.memory_space<smem>>
    %597 = vector.broadcast %596 : f32 to vector<16x16xf32>
    %598 = arith.mulf %597, %587 : vector<16x16xf32>
    %599 = arith.addf %582, %598 : vector<16x16xf32>
    %c142 = arith.constant 142 : index
    %600 = memref.load %arg2[%c142] : memref<144xf32, #tpu.memory_space<smem>>
    %601 = vector.broadcast %600 : f32 to vector<16x16xf32>
    %602 = arith.mulf %601, %587 : vector<16x16xf32>
    %603 = arith.addf %586, %602 : vector<16x16xf32>
    %604 = vector.extract_strided_slice %467 {offsets = [2, 2], sizes = [16, 16], strides = [1, 1]} : vector<18x18xf32> to vector<16x16xf32>
    %c35 = arith.constant 35 : index
    %605 = memref.load %arg2[%c35] : memref<144xf32, #tpu.memory_space<smem>>
    %606 = vector.broadcast %605 : f32 to vector<16x16xf32>
    %607 = arith.mulf %606, %604 : vector<16x16xf32>
    %608 = arith.addf %591, %607 : vector<16x16xf32>
    %c71 = arith.constant 71 : index
    %609 = memref.load %arg2[%c71] : memref<144xf32, #tpu.memory_space<smem>>
    %610 = vector.broadcast %609 : f32 to vector<16x16xf32>
    %611 = arith.mulf %610, %604 : vector<16x16xf32>
    %612 = arith.addf %595, %611 : vector<16x16xf32>
    %c107 = arith.constant 107 : index
    %613 = memref.load %arg2[%c107] : memref<144xf32, #tpu.memory_space<smem>>
    %614 = vector.broadcast %613 : f32 to vector<16x16xf32>
    %615 = arith.mulf %614, %604 : vector<16x16xf32>
    %616 = arith.addf %599, %615 : vector<16x16xf32>
    %c143 = arith.constant 143 : index
    %617 = memref.load %arg2[%c143] : memref<144xf32, #tpu.memory_space<smem>>
    %618 = vector.broadcast %617 : f32 to vector<16x16xf32>
    %619 = arith.mulf %618, %604 : vector<16x16xf32>
    %620 = arith.addf %603, %619 : vector<16x16xf32>
    %c0_22 = arith.constant 0 : index
    %621 = memref.load %arg3[%c0_22] : memref<4xf32, #tpu.memory_space<smem>>
    %622 = vector.broadcast %621 : f32 to vector<16x16xf32>
    %623 = arith.addf %608, %622 : vector<16x16xf32>
    %624 = math.tanh %623 : vector<16x16xf32>
    %cst_23 = arith.constant 5.000000e-01 : f32
    %625 = vector.broadcast %cst_23 : f32 to vector<16x16xf32>
    %626 = arith.mulf %624, %625 : vector<16x16xf32>
    %cst_24 = arith.constant 5.000000e-01 : f32
    %627 = vector.broadcast %cst_24 : f32 to vector<16x16xf32>
    %628 = arith.addf %626, %627 : vector<16x16xf32>
    %c0_25 = arith.constant 0 : index
    %c0_26 = arith.constant 0 : index
    %c0_27 = arith.constant 0 : index
    %c0_28 = arith.constant 0 : index
    %629 = vector.load %arg4[%c0_25, %c0_26, %c0_27, %c0_28] : memref<1x4x16x16xf32, #tpu.memory_space<vmem>>, vector<1x1x16x16xf32>
    %630 = vector.shape_cast %629 : vector<1x1x16x16xf32> to vector<16x16xf32>
    %631 = vector.shape_cast %628 : vector<16x16xf32> to vector<1x1x16x16xf32>
    tpu.vector_store %arg4[%c0_25, %c0_26, %c0_27, %c0_28], %631 {strides = array<i32>} : memref<1x4x16x16xf32, #tpu.memory_space<vmem>>, vector<1x1x16x16xf32>,
    %c1_29 = arith.constant 1 : index
    %632 = memref.load %arg3[%c1_29] : memref<4xf32, #tpu.memory_space<smem>>
    %633 = vector.broadcast %632 : f32 to vector<16x16xf32>
    %634 = arith.addf %612, %633 : vector<16x16xf32>
    %635 = math.tanh %634 : vector<16x16xf32>
    %cst_30 = arith.constant 5.000000e-01 : f32
    %636 = vector.broadcast %cst_30 : f32 to vector<16x16xf32>
    %637 = arith.mulf %635, %636 : vector<16x16xf32>
    %cst_31 = arith.constant 5.000000e-01 : f32
    %638 = vector.broadcast %cst_31 : f32 to vector<16x16xf32>
    %639 = arith.addf %637, %638 : vector<16x16xf32>
    %c0_32 = arith.constant 0 : index
    %c1_33 = arith.constant 1 : index
    %c0_34 = arith.constant 0 : index
    %c0_35 = arith.constant 0 : index
    %640 = vector.load %arg4[%c0_32, %c1_33, %c0_34, %c0_35] : memref<1x4x16x16xf32, #tpu.memory_space<vmem>>, vector<1x1x16x16xf32>
    %641 = vector.shape_cast %640 : vector<1x1x16x16xf32> to vector<16x16xf32>
    %642 = vector.shape_cast %639 : vector<16x16xf32> to vector<1x1x16x16xf32>
    tpu.vector_store %arg4[%c0_32, %c1_33, %c0_34, %c0_35], %642 {strides = array<i32>} : memref<1x4x16x16xf32, #tpu.memory_space<vmem>>, vector<1x1x16x16xf32>,
    %c2_36 = arith.constant 2 : index
    %643 = memref.load %arg3[%c2_36] : memref<4xf32, #tpu.memory_space<smem>>
    %644 = vector.broadcast %643 : f32 to vector<16x16xf32>
    %645 = arith.addf %616, %644 : vector<16x16xf32>
    %646 = math.tanh %645 : vector<16x16xf32>
    %cst_37 = arith.constant 5.000000e-01 : f32
    %647 = vector.broadcast %cst_37 : f32 to vector<16x16xf32>
    %648 = arith.mulf %646, %647 : vector<16x16xf32>
    %cst_38 = arith.constant 5.000000e-01 : f32
    %649 = vector.broadcast %cst_38 : f32 to vector<16x16xf32>
    %650 = arith.addf %648, %649 : vector<16x16xf32>
    %c0_39 = arith.constant 0 : index
    %c2_40 = arith.constant 2 : index
    %c0_41 = arith.constant 0 : index
    %c0_42 = arith.constant 0 : index
    %651 = vector.load %arg4[%c0_39, %c2_40, %c0_41, %c0_42] : memref<1x4x16x16xf32, #tpu.memory_space<vmem>>, vector<1x1x16x16xf32>
    %652 = vector.shape_cast %651 : vector<1x1x16x16xf32> to vector<16x16xf32>
    %653 = vector.shape_cast %650 : vector<16x16xf32> to vector<1x1x16x16xf32>
    tpu.vector_store %arg4[%c0_39, %c2_40, %c0_41, %c0_42], %653 {strides = array<i32>} : memref<1x4x16x16xf32, #tpu.memory_space<vmem>>, vector<1x1x16x16xf32>,
    %c3_43 = arith.constant 3 : index
    %654 = memref.load %arg3[%c3_43] : memref<4xf32, #tpu.memory_space<smem>>
    %655 = vector.broadcast %654 : f32 to vector<16x16xf32>
    %656 = arith.addf %620, %655 : vector<16x16xf32>
    %657 = math.tanh %656 : vector<16x16xf32>
    %cst_44 = arith.constant 5.000000e-01 : f32
    %658 = vector.broadcast %cst_44 : f32 to vector<16x16xf32>
    %659 = arith.mulf %657, %658 : vector<16x16xf32>
    %cst_45 = arith.constant 5.000000e-01 : f32
    %660 = vector.broadcast %cst_45 : f32 to vector<16x16xf32>
    %661 = arith.addf %659, %660 : vector<16x16xf32>
    %c0_46 = arith.constant 0 : index
    %c3_47 = arith.constant 3 : index
    %c0_48 = arith.constant 0 : index
    %c0_49 = arith.constant 0 : index
    %662 = vector.load %arg4[%c0_46, %c3_47, %c0_48, %c0_49] : memref<1x4x16x16xf32, #tpu.memory_space<vmem>>, vector<1x1x16x16xf32>
    %663 = vector.shape_cast %662 : vector<1x1x16x16xf32> to vector<16x16xf32>
    %664 = vector.shape_cast %661 : vector<16x16xf32> to vector<1x1x16x16xf32>
    tpu.vector_store %arg4[%c0_46, %c3_47, %c0_48, %c0_49], %664 {strides = array<i32>} : memref<1x4x16x16xf32, #tpu.memory_space<vmem>>, vector<1x1x16x16xf32>,
    return
  }
  func.func @transform_0(%arg0: i32) -> (i32, i32, i32, i32) {
    %c0_i32 = arith.constant 0 : i32
    %c0_i32_0 = arith.constant 0 : i32
    %c0_i32_1 = arith.constant 0 : i32
    %c0_i32_2 = arith.constant 0 : i32
    return %arg0, %c0_i32, %c0_i32_0, %c0_i32_1 : i32, i32, i32, i32
  }
  func.func @transform_1(%arg0: i32) -> i32 {
    %c0_i32 = arith.constant 0 : i32
    %c0_i32_0 = arith.constant 0 : i32
    return %c0_i32 : i32
  }
  func.func @transform_2(%arg0: i32) -> i32 {
    %c0_i32 = arith.constant 0 : i32
    %c0_i32_0 = arith.constant 0 : i32
    return %c0_i32 : i32
  }
  func.func @transform_3(%arg0: i32) -> (i32, i32, i32, i32) {
    %c0_i32 = arith.constant 0 : i32
    %c0_i32_0 = arith.constant 0 : i32
    %c0_i32_1 = arith.constant 0 : i32
    %c0_i32_2 = arith.constant 0 : i32
    return %arg0, %c0_i32, %c0_i32_0, %c0_i32_1 : i32, i32, i32, i32
  }
}

</mosaic_0001>

<llo_original>
// kernel: conv_out_pallas.1
$region0: #{conv_out_pallas.1}
  #allocation0 [shape = 'u32[]', space=smem, size = 0x4, offset = 0x4, fixed_abs, tag = 'smem constant byte address 0x4 - core index']
  #allocation1 [shape = 'u32[144,128]{1,0:T(1,128)}', space=vmem, size = 0x12000, scoped, tag = 'internal scratch']
  #allocation2 [shape = 'f32[4,18,18]{2,1,0:T(8,128)}', space=vmem, size = 0xc000, scoped, tag = 'scratch operand']
  %s0 = inlined_call_operand.vmem [shape: f32[2,4,16,16], index: 0, kind: input, shape index: {}]
  %s1 = inlined_call_operand.vmem [shape: f32[144], index: 1, kind: input, shape index: {}]
  %s2 = inlined_call_operand.vmem [shape: f32[4], index: 2, kind: input, shape index: {}]
  %s3 = inlined_call_operand.hbm [shape: f32[2,4,16,16], index: 3, kind: output, shape index: {}]
  %s4 = sld [smem:[#allocation0]]
  $region53: #{conv_out_pallas.1} parent=0
    _
  %s6 = ssub.s32 1, %s4
  %s7 = scalar_select 0, %s6, %s4
  $region1: #{conv_out_pallas.1} parent=0
    #allocation3 [shape = 'u8[1024]{0}', space=smem, size = 0x400, scoped, tag = 'input window, operand 1, single buffered']
    #allocation4 [shape = 's32[2]{0}', space=sflag, size = 0x8, scoped, tag = 'scoped memory for conv_out_pallas.1']
    #allocation5 [shape = 's32[2]{0}', space=sflag, size = 0x8, scoped, tag = 'scoped memory for conv_out_pallas.1']
    #allocation6 [shape = 'u8[512]{0}', space=smem, size = 0x200, scoped, tag = 'input window, operand 2, single buffered']
    #allocation7 [shape = 's32[1]{0}', space=sflag, size = 0x4, scoped, tag = 'scoped memory for conv_out_pallas.1']
    #allocation8 [shape = 'u8[65536]{0}', space=vmem, size = 0x10000, scoped, tag = 'output window, operand 0']
    %8 = vsyncpa [#allocation5], 0
    %9 = vsyncpa [#allocation7], 0
    %10 = vsyncpa [#allocation4], 0
    %s11 = scalar_lea.sflag [#allocation4], 1
    %12 = vsyncpa %s11, 0
    loop: start=0, step=1, limit=4
    $region2: #{conv_out_pallas.1} parent=1 // loop_pre_header
      _
    $region3: #{conv_out_pallas.1} parent=1 // loop_header
      %s14 = sphi 0, %s18
      %p15 = scmp.ge.s32.totalorder %s14, 4
      %s24 = sphi 0, %s26
      %s27 = sphi 0, %s24
      %s28 = sphi 0, %s27
      %s44 = sphi 0, %s28
      %s48 = sphi 0, %s48
      %s50 = sphi 0, %s48
      %s51 = sphi 0, %s50
      %s65 = sphi 0, %s51
      %s69 = sphi 0, %s69
      %s71 = sphi 0, %s69
      %s72 = sphi 0, %s71
      %s86 = sphi 0, %s72
      %s92 = sphi 0, %s94
      %s95 = sphi 0, %s92
      %s96 = sphi 0, %s95
      %s112 = sphi 0, %s96
    $region4: #{conv_out_pallas.1} parent=1 // loop_header_branch
      %17 = sbr.rel (%p15) target = $region8
    $region5: #{conv_out_pallas.1} parent=1 // loop_body
      %s19 = ssub.s32 %s14, 1
      %s20 = ssub.s32 %s14, 2
      %s21 = sadd.s32 %s14, 1
      %s22 = ssub.s32 %s14, %s21
      %p23 = scmp.eq.s32.totalorder %s22, 0
      %s25 = sadd.s32 %s24, 1
      %s26 = scalar_select %p23, %s24, %s25
      %p29 = pneg %p23
      %p30 = scmp.eq.s32.totalorder %s14, 1
      %p31 = por %p29, %p30
      %p32 = scmp.ne.s32.totalorder %s24, %s27
      %p33 = scmp.eq.s32.totalorder %s14, 0
      %p34 = por %p32, %p33
      %p35 = scmp.ne.s32.totalorder %s24, %s27
      %p36 = scmp.eq.s32.totalorder %s19, 1
      %p37 = por %p35, %p36
      %p38 = scmp.ne.s32.totalorder %s27, %s28
      %p39 = scmp.eq.s32.totalorder %s19, 0
      %p40 = por %p38, %p39
      %p41 = scmp.ne.s32.totalorder %s27, %s28
      %p42 = scmp.eq.s32.totalorder %s20, 1
      %p43 = por %p41, %p42
      %p45 = scmp.ne.s32.totalorder %s28, %s44
      %p46 = scmp.eq.s32.totalorder %s20, 0
      %p47 = por %p45, %p46
      %s49 = sadd.s32 %s48, 1
      %p52 = scmp.eq.s32.totalorder %s14, 1
      %p53 = scmp.ne.s32.totalorder %s48, %s50
      %p54 = scmp.eq.s32.totalorder %s14, 0
      %p55 = por %p53, %p54
      %p56 = scmp.ne.s32.totalorder %s48, %s50
      %p57 = scmp.eq.s32.totalorder %s19, 1
      %p58 = por %p56, %p57
      %p59 = scmp.ne.s32.totalorder %s50, %s51
      %p60 = scmp.eq.s32.totalorder %s19, 0
      %p61 = por %p59, %p60
      %p62 = scmp.ne.s32.totalorder %s50, %s51
      %p63 = scmp.eq.s32.totalorder %s20, 1
      %p64 = por %p62, %p63
      %p66 = scmp.ne.s32.totalorder %s51, %s65
      %p67 = scmp.eq.s32.totalorder %s20, 0
      %p68 = por %p66, %p67
      %s70 = sadd.s32 %s69, 1
      %p73 = scmp.eq.s32.totalorder %s14, 1
      %p74 = scmp.ne.s32.totalorder %s69, %s71
      %p75 = scmp.eq.s32.totalorder %s14, 0
      %p76 = por %p74, %p75
      %p77 = scmp.ne.s32.totalorder %s69, %s71
      %p78 = scmp.eq.s32.totalorder %s19, 1
      %p79 = por %p77, %p78
      %p80 = scmp.ne.s32.totalorder %s71, %s72
      %p81 = scmp.eq.s32.totalorder %s19, 0
      %p82 = por %p80, %p81
      %p83 = scmp.ne.s32.totalorder %s71, %s72
      %p84 = scmp.eq.s32.totalorder %s20, 1
      %p85 = por %p83, %p84
      %p87 = scmp.ne.s32.totalorder %s72, %s86
      %p88 = scmp.eq.s32.totalorder %s20, 0
      %p89 = por %p87, %p88
      %s90 = ssub.s32 %s14, %s21
      %p91 = scmp.eq.s32.totalorder %s90, 0
      %s93 = sadd.s32 %s92, 1
      %s94 = scalar_select %p91, %s92, %s93
      %p97 = pneg %p91
      %p98 = scmp.eq.s32.totalorder %s14, 1
      %p99 = por %p97, %p98
      %p100 = scmp.ne.s32.totalorder %s92, %s95
      %p101 = scmp.eq.s32.totalorder %s14, 0
      %p102 = por %p100, %p101
      %p103 = scmp.ne.s32.totalorder %s92, %s95
      %p104 = scmp.eq.s32.totalorder %s19, 1
      %p105 = por %p103, %p104
      %p106 = scmp.ne.s32.totalorder %s95, %s96
      %p107 = scmp.eq.s32.totalorder %s19, 0
      %p108 = por %p106, %p107
      %p109 = scmp.ne.s32.totalorder %s95, %s96
      %p110 = scmp.eq.s32.totalorder %s20, 1
      %p111 = por %p109, %p110
      %p113 = scmp.ne.s32.totalorder %s96, %s112
      %p114 = scmp.eq.s32.totalorder %s20, 0
      %p115 = por %p113, %p114
      %p116 = scmp.le.s32.totalorder 1, %s14
      %p117 = scmp.lt.s32.totalorder %s14, 3
      %p118 = pnand %p116, %p117
      %p119 = pneg %p118
      // Predicated region
      $region9: #{conv_out_pallas.1} parent=5 // pred_check
        _
      $region10: #{conv_out_pallas.1} parent=5 // pred_check_branch
        %121 = sbr.rel (%p118) target = $region12
      $region11: #{conv_out_pallas.1} parent=5 // pred_region
        %s122 = ssub.s32 %s14, 1
        // Predicated region
        $region13: #{conv_out_pallas.1} parent=11 // pred_check
          %p123 = pneg %p61
        $region14: #{conv_out_pallas.1} parent=11 // pred_check_branch
          %125 = sbr.rel (%p123) target = $region16
        $region15: #{conv_out_pallas.1} parent=11 // pred_region
          %s127 = ssub.s32 32, 32
          %128 = vsyncadd [#allocation5], %s127
          %s130 = sshll.u32 %s1, 4
          %s131 = int_to_ptr.vmem [resolvable:$true] %s130
          %133 = dma.vmem_to_smem %s131, 32, [#allocation3], [#allocation5]
        $region16: #{conv_out_pallas.1} parent=11 // pred_fallthru
          _
        // Predicated region
        $region17: #{conv_out_pallas.1} parent=11 // pred_check
          %p134 = pneg %p82
        $region18: #{conv_out_pallas.1} parent=11 // pred_check_branch
          %136 = sbr.rel (%p134) target = $region20
        $region19: #{conv_out_pallas.1} parent=11 // pred_region
          %s138 = ssub.s32 16, 16
          %139 = vsyncadd [#allocation7], %s138
          %s141 = sshll.u32 %s2, 4
          %s142 = int_to_ptr.vmem [resolvable:$true] %s141
          %144 = dma.vmem_to_smem %s142, 16, [#allocation6], [#allocation7]
        $region20: #{conv_out_pallas.1} parent=11 // pred_fallthru
          _
      $region12: #{conv_out_pallas.1} parent=5 // pred_fallthru
        _
      %p145 = scmp.lt.s32.totalorder %s14, 2
      // Predicated region
      $region21: #{conv_out_pallas.1} parent=5 // pred_check
        %p146 = pneg %p145
      $region22: #{conv_out_pallas.1} parent=5 // pred_check_branch
        %148 = sbr.rel (%p146) target = $region24
      $region23: #{conv_out_pallas.1} parent=5 // pred_region
        // Predicated region
        $region25: #{conv_out_pallas.1} parent=23 // pred_check
          %p149 = pneg %p34
        $region26: #{conv_out_pallas.1} parent=23 // pred_check_branch
          %151 = sbr.rel (%p149) target = $region28
        $region27: #{conv_out_pallas.1} parent=23 // pred_region
          %p152 = scmp.lt.s32.totalorder %s14, 1
          %s153 = scalar_select %p152, %s14, 1
          %s154 = smul.addr %s153, 8
          %s155 = smul.addr %s154, 8
          %s156 = scalar_lea.vmem %s0, %s155
        $region28: #{conv_out_pallas.1} parent=23 // pred_fallthru
          _
      $region24: #{conv_out_pallas.1} parent=5 // pred_fallthru
        _
      %p157 = scmp.le.s32.totalorder 1, %s14
      %p158 = scmp.lt.s32.totalorder %s14, 3
      %p159 = pnand %p157, %p158
      %p160 = pneg %p159
      // Predicated region
      $region29: #{conv_out_pallas.1} parent=5 // pred_check
        _
      $region30: #{conv_out_pallas.1} parent=5 // pred_check_branch
        %162 = sbr.rel (%p159) target = $region32
      $region31: #{conv_out_pallas.1} parent=5 // pred_region
        %s163 = ssub.s32 %s14, 1
        // Predicated region
        $region33: #{conv_out_pallas.1} parent=31 // pred_check
          %p164 = pneg %p61
        $region34: #{conv_out_pallas.1} parent=31 // pred_check_branch
          %166 = sbr.rel (%p164) target = $region36
        $region35: #{conv_out_pallas.1} parent=31 // pred_region
          %167 = dma.done [#allocation5], 32
        $region36: #{conv_out_pallas.1} parent=31 // pred_fallthru
          _
        // Predicated region
        $region37: #{conv_out_pallas.1} parent=31 // pred_check
          %p168 = pneg %p82
        $region38: #{conv_out_pallas.1} parent=31 // pred_check_branch
          %170 = sbr.rel (%p168) target = $region40
        $region39: #{conv_out_pallas.1} parent=31 // pred_region
          %171 = dma.done [#allocation7], 16
        $region40: #{conv_out_pallas.1} parent=31 // pred_fallthru
          _
        %172 = sfence
        %p173 = scmp.lt.s32.totalorder %s19, 1
        %s174 = scalar_select %p173, %s19, 1
        %s175 = smul.addr %s174, 8
        %s176 = smul.addr %s175, 8
        %s177 = scalar_lea.vmem %s0, %s176
        %p178 = pneg %p40
        %p179 = pneg %p37
        %p180 = pneg %p61
        %p181 = pneg %p58
        %p182 = pneg %p82
        %p183 = pneg %p79
        %p184 = pneg %p108
        %p185 = pneg %p105
        %s186 = sand.u32 %s95, 1
        %s187 = scalar_lea.sflag [#allocation4], %s186
        %s188 = sand.u32 %s95, 1
        %s189 = smul.addr %s188, 64
        %s190 = scalar_lea.vmem [#allocation8], %s189
        %p191 = scmp.lt.s32.totalorder %s19, 1
        %s192 = scalar_select %p191, %s19, 1
        %s193 = smul.addr %s192, 8
        %s194 = smul.addr %s193, 8
        %s195 = scalar_lea.vmem %s0, %s194
        %vm196 = vcmask 146432
        %197 = vst.msk [vmem:[#allocation2] sm:$0xff] %vm196, 0.0
        %198 = vst.msk [vmem:[#allocation2 + $0x8] sm:$0xff] %vm196, 0.0
        %vm199 = vcmask 140288
        %200 = vst.msk [vmem:[#allocation2 + $0x10] sm:$0x3] %vm199, 0.0
        %201 = vst.msk [vmem:[#allocation2 + $0x18] sm:$0xff] %vm196, 0.0
        %202 = vst.msk [vmem:[#allocation2 + $0x20] sm:$0xff] %vm196, 0.0
        %203 = vst.msk [vmem:[#allocation2 + $0x28] sm:$0x3] %vm199, 0.0
        %204 = vst.msk [vmem:[#allocation2 + $0x30] sm:$0xff] %vm196, 0.0
        %205 = vst.msk [vmem:[#allocation2 + $0x38] sm:$0xff] %vm196, 0.0
        %206 = vst.msk [vmem:[#allocation2 + $0x40] sm:$0x3] %vm199, 0.0
        %207 = vst.msk [vmem:[#allocation2 + $0x48] sm:$0xff] %vm196, 0.0
        %208 = vst.msk [vmem:[#allocation2 + $0x50] sm:$0xff] %vm196, 0.0
        %209 = vst.msk [vmem:[#allocation2 + $0x58] sm:$0x3] %vm199, 0.0
        %v210 = vld [vmem:[%s195] sm:$0xff]
        %v211 = vld [vmem:[%s195 + $0x8] sm:$0xff]
        %v212 = vld [vmem:[%s195 + $0x10] sm:$0xff]
        %v213 = vld [vmem:[%s195 + $0x18] sm:$0xff]
        %v214 = vld [vmem:[%s195 + $0x20] sm:$0xff]
        %v215 = vld [vmem:[%s195 + $0x28] sm:$0xff]
        %v216 = vld [vmem:[%s195 + $0x30] sm:$0xff]
        %v217 = vld [vmem:[%s195 + $0x38] sm:$0xff]
        %226 = vrot.lane.b32.xlu0 %v210, 1
        %v227 = vpop.permute.xlu0 %226
        %228 = vrot.lane.b32.xlu0 %v211, 1
        %v229 = vpop.permute.xlu0 %228
        %230 = vrot.lane.b32.xlu0 %v212, 1
        %v231 = vpop.permute.xlu0 %230
        %232 = vrot.lane.b32.xlu0 %v213, 1
        %v233 = vpop.permute.xlu0 %232
        %234 = vrot.lane.b32.xlu0 %v214, 1
        %v235 = vpop.permute.xlu0 %234
        %236 = vrot.lane.b32.xlu0 %v215, 1
        %v237 = vpop.permute.xlu0 %236
        %238 = vrot.lane.b32.xlu0 %v216, 1
        %v239 = vpop.permute.xlu0 %238
        %240 = vrot.lane.b32.xlu0 %v217, 1
        %v241 = vpop.permute.xlu0 %240
        %vm250 = vcmask 138248
        %251 = vst.msk [vmem:[#allocation2 + $0x1] sm:$0xff] %vm250, %v227
        %252 = vst.msk [vmem:[#allocation2 + $0x9] sm:$0xff] %vm250, %v229
        %253 = vst.msk [vmem:[#allocation2 + $0x19] sm:$0xff] %vm250, %v231
        %254 = vst.msk [vmem:[#allocation2 + $0x21] sm:$0xff] %vm250, %v233
        %255 = vst.msk [vmem:[#allocation2 + $0x31] sm:$0xff] %vm250, %v235
        %256 = vst.msk [vmem:[#allocation2 + $0x39] sm:$0xff] %vm250, %v237
        %257 = vst.msk [vmem:[#allocation2 + $0x49] sm:$0xff] %vm250, %v239
        %258 = vst.msk [vmem:[#allocation2 + $0x51] sm:$0xff] %vm250, %v241
        %v259 = vld [vmem:[#allocation2] sm:$0xff]
        %v260 = vld [vmem:[#allocation2 + $0x8] sm:$0xff]
        %v261 = vld [vmem:[#allocation2 + $0x10] sm:$0x3]
        %s262 = sld [smem:[#allocation3]]
        %v263 = vstv %s262
        %v264 = vmul.f32 %v263, %v259
        %v265 = vmul.f32 %v263, %v260
        %s266 = sld [smem:[#allocation3 + $0x24]]
        %v267 = vstv %s266
        %v268 = vmul.f32 %v267, %v259
        %v269 = vmul.f32 %v267, %v260
        %s270 = sld [smem:[#allocation3 + $0x48]]
        %v271 = vstv %s270
        %v272 = vmul.f32 %v271, %v259
        %v273 = vmul.f32 %v271, %v260
        %s274 = sld [smem:[#allocation3 + $0x6c]]
        %v275 = vstv %s274
        %v276 = vmul.f32 %v275, %v259
        %v277 = vmul.f32 %v275, %v260
        %s278 = sld [smem:[#allocation3 + $0x1]]
        %v279 = vstv %s278
        %v280 = vmul.f32 %v279, %v259
        %v281 = vmul.f32 %v279, %v260
        %284 = vrot.lane.b32.xlu0 %v280, 127
        %v285 = vpop.permute.xlu0 %284
        %286 = vrot.lane.b32.xlu0 %v281, 127
        %v287 = vpop.permute.xlu0 %286
        %v290 = vadd.f32 %v264, %v285
        %v291 = vadd.f32 %v265, %v287
        %s292 = sld [smem:[#allocation3 + $0x25]]
        %v293 = vstv %s292
        %v294 = vmul.f32 %v293, %v259
        %v295 = vmul.f32 %v293, %v260
        %298 = vrot.lane.b32.xlu0 %v294, 127
        %v299 = vpop.permute.xlu0 %298
        %300 = vrot.lane.b32.xlu0 %v295, 127
        %v301 = vpop.permute.xlu0 %300
        %v304 = vadd.f32 %v268, %v299
        %v305 = vadd.f32 %v269, %v301
        %s306 = sld [smem:[#allocation3 + $0x49]]
        %v307 = vstv %s306
        %v308 = vmul.f32 %v307, %v259
        %v309 = vmul.f32 %v307, %v260
        %312 = vrot.lane.b32.xlu0 %v308, 127
        %v313 = vpop.permute.xlu0 %312
        %314 = vrot.lane.b32.xlu0 %v309, 127
        %v315 = vpop.permute.xlu0 %314
        %v318 = vadd.f32 %v272, %v313
        %v319 = vadd.f32 %v273, %v315
        %s320 = sld [smem:[#allocation3 + $0x6d]]
        %v321 = vstv %s320
        %v322 = vmul.f32 %v321, %v259
        %v323 = vmul.f32 %v321, %v260
        %326 = vrot.lane.b32.xlu0 %v322, 127
        %v327 = vpop.permute.xlu0 %326
        %328 = vrot.lane.b32.xlu0 %v323, 127
        %v329 = vpop.permute.xlu0 %328
        %v332 = vadd.f32 %v276, %v327
        %v333 = vadd.f32 %v277, %v329
        %s334 = sld [smem:[#allocation3 + $0x2]]
        %v335 = vstv %s334
        %v336 = vmul.f32 %v335, %v259
        %v337 = vmul.f32 %v335, %v260
        %340 = vrot.lane.b32.xlu0 %v336, 126
        %v341 = vpop.permute.xlu0 %340
        %342 = vrot.lane.b32.xlu0 %v337, 126
        %v343 = vpop.permute.xlu0 %342
        %v346 = vadd.f32 %v290, %v341
        %v347 = vadd.f32 %v291, %v343
        %s348 = sld [smem:[#allocation3 + $0x26]]
        %v349 = vstv %s348
        %v350 = vmul.f32 %v349, %v259
        %v351 = vmul.f32 %v349, %v260
        %354 = vrot.lane.b32.xlu0 %v350, 126
        %v355 = vpop.permute.xlu0 %354
        %356 = vrot.lane.b32.xlu0 %v351, 126
        %v357 = vpop.permute.xlu0 %356
        %v360 = vadd.f32 %v304, %v355
        %v361 = vadd.f32 %v305, %v357
        %s362 = sld [smem:[#allocation3 + $0x4a]]
        %v363 = vstv %s362
        %v364 = vmul.f32 %v363, %v259
        %v365 = vmul.f32 %v363, %v260
        %368 = vrot.lane.b32.xlu0 %v364, 126
        %v369 = vpop.permute.xlu0 %368
        %370 = vrot.lane.b32.xlu0 %v365, 126
        %v371 = vpop.permute.xlu0 %370
        %v374 = vadd.f32 %v318, %v369
        %v375 = vadd.f32 %v319, %v371
        %s376 = sld [smem:[#allocation3 + $0x6e]]
        %v377 = vstv %s376
        %v378 = vmul.f32 %v377, %v259
        %v379 = vmul.f32 %v377, %v260
        %382 = vrot.lane.b32.xlu0 %v378, 126
        %v383 = vpop.permute.xlu0 %382
        %384 = vrot.lane.b32.xlu0 %v379, 126
        %v385 = vpop.permute.xlu0 %384
        %v388 = vadd.f32 %v332, %v383
        %v389 = vadd.f32 %v333, %v385
        %s390 = sld [smem:[#allocation3 + $0x3]]
        %v391 = vstv %s390
        %v392 = vmul.f32 %v391, %v259
        %v393 = vmul.f32 %v391, %v260
        %v394 = vmul.f32 %v391, %v261
        %vm398 = vcmask 1046528
        %v399 = vrot.slane %v392, 1
        %v400 = vrot.slane %v393, 1
        %v401 = vsel %vm398, %v399, %v400
        %v402 = vrot.slane %v394, 1
        %v403 = vsel %vm398, %v400, %v402
        %v406 = vadd.f32 %v346, %v401
        %v407 = vadd.f32 %v347, %v403
        %s408 = sld [smem:[#allocation3 + $0x27]]
        %v409 = vstv %s408
        %v410 = vmul.f32 %v409, %v259
        %v411 = vmul.f32 %v409, %v260
        %v412 = vmul.f32 %v409, %v261
        %v416 = vrot.slane %v410, 1
        %v417 = vrot.slane %v411, 1
        %v418 = vsel %vm398, %v416, %v417
        %v419 = vrot.slane %v412, 1
        %v420 = vsel %vm398, %v417, %v419
        %v423 = vadd.f32 %v360, %v418
        %v424 = vadd.f32 %v361, %v420
        %s425 = sld [smem:[#allocation3 + $0x4b]]
        %v426 = vstv %s425
        %v427 = vmul.f32 %v426, %v259
        %v428 = vmul.f32 %v426, %v260
        %v429 = vmul.f32 %v426, %v261
        %v433 = vrot.slane %v427, 1
        %v434 = vrot.slane %v428, 1
        %v435 = vsel %vm398, %v433, %v434
        %v436 = vrot.slane %v429, 1
        %v437 = vsel %vm398, %v434, %v436
        %v440 = vadd.f32 %v374, %v435
        %v441 = vadd.f32 %v375, %v437
        %s442 = sld [smem:[#allocation3 + $0x6f]]
        %v443 = vstv %s442
        %v444 = vmul.f32 %v443, %v259
        %v445 = vmul.f32 %v443, %v260
        %v446 = vmul.f32 %v443, %v261
        %v450 = vrot.slane %v444, 1
        %v451 = vrot.slane %v445, 1
        %v452 = vsel %vm398, %v450, %v451
        %v453 = vrot.slane %v446, 1
        %v454 = vsel %vm398, %v451, %v453
        %v457 = vadd.f32 %v388, %v452
        %v458 = vadd.f32 %v389, %v454
        %s459 = sld [smem:[#allocation3 + $0x4]]
        %v460 = vstv %s459
        %v461 = vmul.f32 %v460, %v259
        %v462 = vmul.f32 %v460, %v260
        %v463 = vmul.f32 %v460, %v261
        %v467 = vrot.slane %v461, 1
        %v468 = vrot.slane %v462, 1
        %v469 = vsel %vm398, %v467, %v468
        %v470 = vrot.slane %v463, 1
        %v471 = vsel %vm398, %v468, %v470
        %472 = vrot.lane.b32.xlu0 %v469, 127
        %v473 = vpop.permute.xlu0 %472
        %474 = vrot.lane.b32.xlu0 %v471, 127
        %v475 = vpop.permute.xlu0 %474
        %v478 = vadd.f32 %v406, %v473
        %v479 = vadd.f32 %v407, %v475
        %s480 = sld [smem:[#allocation3 + $0x28]]
        %v481 = vstv %s480
        %v482 = vmul.f32 %v481, %v259
        %v483 = vmul.f32 %v481, %v260
        %v484 = vmul.f32 %v481, %v261
        %v488 = vrot.slane %v482, 1
        %v489 = vrot.slane %v483, 1
        %v490 = vsel %vm398, %v488, %v489
        %v491 = vrot.slane %v484, 1
        %v492 = vsel %vm398, %v489, %v491
        %493 = vrot.lane.b32.xlu0 %v490, 127
        %v494 = vpop.permute.xlu0 %493
        %495 = vrot.lane.b32.xlu0 %v492, 127
        %v496 = vpop.permute.xlu0 %495
        %v499 = vadd.f32 %v423, %v494
        %v500 = vadd.f32 %v424, %v496
        %s501 = sld [smem:[#allocation3 + $0x4c]]
        %v502 = vstv %s501
        %v503 = vmul.f32 %v502, %v259
        %v504 = vmul.f32 %v502, %v260
        %v505 = vmul.f32 %v502, %v261
        %v509 = vrot.slane %v503, 1
        %v510 = vrot.slane %v504, 1
        %v511 = vsel %vm398, %v509, %v510
        %v512 = vrot.slane %v505, 1
        %v513 = vsel %vm398, %v510, %v512
        %514 = vrot.lane.b32.xlu0 %v511, 127
        %v515 = vpop.permute.xlu0 %514
        %516 = vrot.lane.b32.xlu0 %v513, 127
        %v517 = vpop.permute.xlu0 %516
        %v520 = vadd.f32 %v440, %v515
        %v521 = vadd.f32 %v441, %v517
        %s522 = sld [smem:[#allocation3 + $0x70]]
        %v523 = vstv %s522
        %v524 = vmul.f32 %v523, %v259
        %v525 = vmul.f32 %v523, %v260
        %v526 = vmul.f32 %v523, %v261
        %v530 = vrot.slane %v524, 1
        %v531 = vrot.slane %v525, 1
        %v532 = vsel %vm398, %v530, %v531
        %v533 = vrot.slane %v526, 1
        %v534 = vsel %vm398, %v531, %v533
        %535 = vrot.lane.b32.xlu0 %v532, 127
        %v536 = vpop.permute.xlu0 %535
        %537 = vrot.lane.b32.xlu0 %v534, 127
        %v538 = vpop.permute.xlu0 %537
        %v541 = vadd.f32 %v457, %v536
        %v542 = vadd.f32 %v458, %v538
        %s543 = sld [smem:[#allocation3 + $0x5]]
        %v544 = vstv %s543
        %v545 = vmul.f32 %v544, %v259
        %v546 = vmul.f32 %v544, %v260
        %v547 = vmul.f32 %v544, %v261
        %v551 = vrot.slane %v545, 1
        %v552 = vrot.slane %v546, 1
        %v553 = vsel %vm398, %v551, %v552
        %v554 = vrot.slane %v547, 1
        %v555 = vsel %vm398, %v552, %v554
        %556 = vrot.lane.b32.xlu0 %v553, 126
        %v557 = vpop.permute.xlu0 %556
        %558 = vrot.lane.b32.xlu0 %v555, 126
        %v559 = vpop.permute.xlu0 %558
        %v562 = vadd.f32 %v478, %v557
        %v563 = vadd.f32 %v479, %v559
        %s564 = sld [smem:[#allocation3 + $0x29]]
        %v565 = vstv %s564
        %v566 = vmul.f32 %v565, %v259
        %v567 = vmul.f32 %v565, %v260
        %v568 = vmul.f32 %v565, %v261
        %v572 = vrot.slane %v566, 1
        %v573 = vrot.slane %v567, 1
        %v574 = vsel %vm398, %v572, %v573
        %v575 = vrot.slane %v568, 1
        %v576 = vsel %vm398, %v573, %v575
        %577 = vrot.lane.b32.xlu0 %v574, 126
        %v578 = vpop.permute.xlu0 %577
        %579 = vrot.lane.b32.xlu0 %v576, 126
        %v580 = vpop.permute.xlu0 %579
        %v583 = vadd.f32 %v499, %v578
        %v584 = vadd.f32 %v500, %v580
        %s585 = sld [smem:[#allocation3 + $0x4d]]
        %v586 = vstv %s585
        %v587 = vmul.f32 %v586, %v259
        %v588 = vmul.f32 %v586, %v260
        %v589 = vmul.f32 %v586, %v261
        %v593 = vrot.slane %v587, 1
        %v594 = vrot.slane %v588, 1
        %v595 = vsel %vm398, %v593, %v594
        %v596 = vrot.slane %v589, 1
        %v597 = vsel %vm398, %v594, %v596
        %598 = vrot.lane.b32.xlu0 %v595, 126
        %v599 = vpop.permute.xlu0 %598
        %600 = vrot.lane.b32.xlu0 %v597, 126
        %v601 = vpop.permute.xlu0 %600
        %v604 = vadd.f32 %v520, %v599
        %v605 = vadd.f32 %v521, %v601
        %s606 = sld [smem:[#allocation3 + $0x71]]
        %v607 = vstv %s606
        %v608 = vmul.f32 %v607, %v259
        %v609 = vmul.f32 %v607, %v260
        %v610 = vmul.f32 %v607, %v261
        %v614 = vrot.slane %v608, 1
        %v615 = vrot.slane %v609, 1
        %v616 = vsel %vm398, %v614, %v615
        %v617 = vrot.slane %v610, 1
        %v618 = vsel %vm398, %v615, %v617
        %619 = vrot.lane.b32.xlu0 %v616, 126
        %v620 = vpop.permute.xlu0 %619
        %621 = vrot.lane.b32.xlu0 %v618, 126
        %v622 = vpop.permute.xlu0 %621
        %v625 = vadd.f32 %v541, %v620
        %v626 = vadd.f32 %v542, %v622
        %s627 = sld [smem:[#allocation3 + $0x6]]
        %v628 = vstv %s627
        %v629 = vmul.f32 %v628, %v259
        %v630 = vmul.f32 %v628, %v260
        %v631 = vmul.f32 %v628, %v261
        %vm635 = vcmask 1045504
        %v636 = vrot.slane %v629, 2
        %v637 = vrot.slane %v630, 2
        %v638 = vsel %vm635, %v636, %v637
        %v639 = vrot.slane %v631, 2
        %v640 = vsel %vm635, %v637, %v639
        %v643 = vadd.f32 %v562, %v638
        %v644 = vadd.f32 %v563, %v640
        %s645 = sld [smem:[#allocation3 + $0x2a]]
        %v646 = vstv %s645
        %v647 = vmul.f32 %v646, %v259
        %v648 = vmul.f32 %v646, %v260
        %v649 = vmul.f32 %v646, %v261
        %v653 = vrot.slane %v647, 2
        %v654 = vrot.slane %v648, 2
        %v655 = vsel %vm635, %v653, %v654
        %v656 = vrot.slane %v649, 2
        %v657 = vsel %vm635, %v654, %v656
        %v660 = vadd.f32 %v583, %v655
        %v661 = vadd.f32 %v584, %v657
        %s662 = sld [smem:[#allocation3 + $0x4e]]
        %v663 = vstv %s662
        %v664 = vmul.f32 %v663, %v259
        %v665 = vmul.f32 %v663, %v260
        %v666 = vmul.f32 %v663, %v261
        %v670 = vrot.slane %v664, 2
        %v671 = vrot.slane %v665, 2
        %v672 = vsel %vm635, %v670, %v671
        %v673 = vrot.slane %v666, 2
        %v674 = vsel %vm635, %v671, %v673
        %v677 = vadd.f32 %v604, %v672
        %v678 = vadd.f32 %v605, %v674
        %s679 = sld [smem:[#allocation3 + $0x72]]
        %v680 = vstv %s679
        %v681 = vmul.f32 %v680, %v259
        %v682 = vmul.f32 %v680, %v260
        %v683 = vmul.f32 %v680, %v261
        %v687 = vrot.slane %v681, 2
        %v688 = vrot.slane %v682, 2
        %v689 = vsel %vm635, %v687, %v688
        %v690 = vrot.slane %v683, 2
        %v691 = vsel %vm635, %v688, %v690
        %v694 = vadd.f32 %v625, %v689
        %v695 = vadd.f32 %v626, %v691
        %s696 = sld [smem:[#allocation3 + $0x7]]
        %v697 = vstv %s696
        %v698 = vmul.f32 %v697, %v259
        %v699 = vmul.f32 %v697, %v260
        %v700 = vmul.f32 %v697, %v261
        %v704 = vrot.slane %v698, 2
        %v705 = vrot.slane %v699, 2
        %v706 = vsel %vm635, %v704, %v705
        %v707 = vrot.slane %v700, 2
        %v708 = vsel %vm635, %v705, %v707
        %709 = vrot.lane.b32.xlu0 %v706, 127
        %v710 = vpop.permute.xlu0 %709
        %711 = vrot.lane.b32.xlu0 %v708, 127
        %v712 = vpop.permute.xlu0 %711
        %v715 = vadd.f32 %v643, %v710
        %v716 = vadd.f32 %v644, %v712
        %s717 = sld [smem:[#allocation3 + $0x2b]]
        %v718 = vstv %s717
        %v719 = vmul.f32 %v718, %v259
        %v720 = vmul.f32 %v718, %v260
        %v721 = vmul.f32 %v718, %v261
        %v725 = vrot.slane %v719, 2
        %v726 = vrot.slane %v720, 2
        %v727 = vsel %vm635, %v725, %v726
        %v728 = vrot.slane %v721, 2
        %v729 = vsel %vm635, %v726, %v728
        %730 = vrot.lane.b32.xlu0 %v727, 127
        %v731 = vpop.permute.xlu0 %730
        %732 = vrot.lane.b32.xlu0 %v729, 127
        %v733 = vpop.permute.xlu0 %732
        %v736 = vadd.f32 %v660, %v731
        %v737 = vadd.f32 %v661, %v733
        %s738 = sld [smem:[#allocation3 + $0x4f]]
        %v739 = vstv %s738
        %v740 = vmul.f32 %v739, %v259
        %v741 = vmul.f32 %v739, %v260
        %v742 = vmul.f32 %v739, %v261
        %v746 = vrot.slane %v740, 2
        %v747 = vrot.slane %v741, 2
        %v748 = vsel %vm635, %v746, %v747
        %v749 = vrot.slane %v742, 2
        %v750 = vsel %vm635, %v747, %v749
        %751 = vrot.lane.b32.xlu0 %v748, 127
        %v752 = vpop.permute.xlu0 %751
        %753 = vrot.lane.b32.xlu0 %v750, 127
        %v754 = vpop.permute.xlu0 %753
        %v757 = vadd.f32 %v677, %v752
        %v758 = vadd.f32 %v678, %v754
        %s759 = sld [smem:[#allocation3 + $0x73]]
        %v760 = vstv %s759
        %v761 = vmul.f32 %v760, %v259
        %v762 = vmul.f32 %v760, %v260
        %v763 = vmul.f32 %v760, %v261
        %v767 = vrot.slane %v761, 2
        %v768 = vrot.slane %v762, 2
        %v769 = vsel %vm635, %v767, %v768
        %v770 = vrot.slane %v763, 2
        %v771 = vsel %vm635, %v768, %v770
        %772 = vrot.lane.b32.xlu0 %v769, 127
        %v773 = vpop.permute.xlu0 %772
        %774 = vrot.lane.b32.xlu0 %v771, 127
        %v775 = vpop.permute.xlu0 %774
        %v778 = vadd.f32 %v694, %v773
        %v779 = vadd.f32 %v695, %v775
        %s780 = sld [smem:[#allocation3 + $0x8]]
        %v781 = vstv %s780
        %v782 = vmul.f32 %v781, %v259
        %v783 = vmul.f32 %v781, %v260
        %v784 = vmul.f32 %v781, %v261
        %v788 = vrot.slane %v782, 2
        %v789 = vrot.slane %v783, 2
        %v790 = vsel %vm635, %v788, %v789
        %v791 = vrot.slane %v784, 2
        %v792 = vsel %vm635, %v789, %v791
        %793 = vrot.lane.b32.xlu0 %v790, 126
        %v794 = vpop.permute.xlu0 %793
        %795 = vrot.lane.b32.xlu0 %v792, 126
        %v796 = vpop.permute.xlu0 %795
        %v799 = vadd.f32 %v715, %v794
        %v800 = vadd.f32 %v716, %v796
        %s801 = sld [smem:[#allocation3 + $0x2c]]
        %v802 = vstv %s801
        %v803 = vmul.f32 %v802, %v259
        %v804 = vmul.f32 %v802, %v260
        %v805 = vmul.f32 %v802, %v261
        %v809 = vrot.slane %v803, 2
        %v810 = vrot.slane %v804, 2
        %v811 = vsel %vm635, %v809, %v810
        %v812 = vrot.slane %v805, 2
        %v813 = vsel %vm635, %v810, %v812
        %814 = vrot.lane.b32.xlu0 %v811, 126
        %v815 = vpop.permute.xlu0 %814
        %816 = vrot.lane.b32.xlu0 %v813, 126
        %v817 = vpop.permute.xlu0 %816
        %v820 = vadd.f32 %v736, %v815
        %v821 = vadd.f32 %v737, %v817
        %s822 = sld [smem:[#allocation3 + $0x50]]
        %v823 = vstv %s822
        %v824 = vmul.f32 %v823, %v259
        %v825 = vmul.f32 %v823, %v260
        %v826 = vmul.f32 %v823, %v261
        %v830 = vrot.slane %v824, 2
        %v831 = vrot.slane %v825, 2
        %v832 = vsel %vm635, %v830, %v831
        %v833 = vrot.slane %v826, 2
        %v834 = vsel %vm635, %v831, %v833
        %835 = vrot.lane.b32.xlu0 %v832, 126
        %v836 = vpop.permute.xlu0 %835
        %837 = vrot.lane.b32.xlu0 %v834, 126
        %v838 = vpop.permute.xlu0 %837
        %v841 = vadd.f32 %v757, %v836
        %v842 = vadd.f32 %v758, %v838
        %s843 = sld [smem:[#allocation3 + $0x74]]
        %v844 = vstv %s843
        %v845 = vmul.f32 %v844, %v259
        %v846 = vmul.f32 %v844, %v260
        %v847 = vmul.f32 %v844, %v261
        %v851 = vrot.slane %v845, 2
        %v852 = vrot.slane %v846, 2
        %v853 = vsel %vm635, %v851, %v852
        %v854 = vrot.slane %v847, 2
        %v855 = vsel %vm635, %v852, %v854
        %856 = vrot.lane.b32.xlu0 %v853, 126
        %v857 = vpop.permute.xlu0 %856
        %858 = vrot.lane.b32.xlu0 %v855, 126
        %v859 = vpop.permute.xlu0 %858
        %v862 = vadd.f32 %v778, %v857
        %v863 = vadd.f32 %v779, %v859
        %s864 = scalar_lea.vmem [#allocation2], 24
        %v865 = vld [vmem:[%s864] sm:$0xff]
        %v866 = vld [vmem:[%s864 + $0x8] sm:$0xff]
        %v867 = vld [vmem:[%s864 + $0x10] sm:$0x3]
        %s868 = sld [smem:[#allocation3 + $0x9]]
        %v869 = vstv %s868
        %v870 = vmul.f32 %v869, %v865
        %v871 = vmul.f32 %v869, %v866
        %v872 = vadd.f32 %v799, %v870
        %v873 = vadd.f32 %v800, %v871
        %s874 = sld [smem:[#allocation3 + $0x2d]]
        %v875 = vstv %s874
        %v876 = vmul.f32 %v875, %v865
        %v877 = vmul.f32 %v875, %v866
        %v878 = vadd.f32 %v820, %v876
        %v879 = vadd.f32 %v821, %v877
        %s880 = sld [smem:[#allocation3 + $0x51]]
        %v881 = vstv %s880
        %v882 = vmul.f32 %v881, %v865
        %v883 = vmul.f32 %v881, %v866
        %v884 = vadd.f32 %v841, %v882
        %v885 = vadd.f32 %v842, %v883
        %s886 = sld [smem:[#allocation3 + $0x75]]
        %v887 = vstv %s886
        %v888 = vmul.f32 %v887, %v865
        %v889 = vmul.f32 %v887, %v866
        %v890 = vadd.f32 %v862, %v888
        %v891 = vadd.f32 %v863, %v889
        %s892 = sld [smem:[#allocation3 + $0xa]]
        %v893 = vstv %s892
        %v894 = vmul.f32 %v893, %v865
        %v895 = vmul.f32 %v893, %v866
        %898 = vrot.lane.b32.xlu0 %v894, 127
        %v899 = vpop.permute.xlu0 %898
        %900 = vrot.lane.b32.xlu0 %v895, 127
        %v901 = vpop.permute.xlu0 %900
        %v904 = vadd.f32 %v872, %v899
        %v905 = vadd.f32 %v873, %v901
        %s906 = sld [smem:[#allocation3 + $0x2e]]
        %v907 = vstv %s906
        %v908 = vmul.f32 %v907, %v865
        %v909 = vmul.f32 %v907, %v866
        %912 = vrot.lane.b32.xlu0 %v908, 127
        %v913 = vpop.permute.xlu0 %912
        %914 = vrot.lane.b32.xlu0 %v909, 127
        %v915 = vpop.permute.xlu0 %914
        %v918 = vadd.f32 %v878, %v913
        %v919 = vadd.f32 %v879, %v915
        %s920 = sld [smem:[#allocation3 + $0x52]]
        %v921 = vstv %s920
        %v922 = vmul.f32 %v921, %v865
        %v923 = vmul.f32 %v921, %v866
        %926 = vrot.lane.b32.xlu0 %v922, 127
        %v927 = vpop.permute.xlu0 %926
        %928 = vrot.lane.b32.xlu0 %v923, 127
        %v929 = vpop.permute.xlu0 %928
        %v932 = vadd.f32 %v884, %v927
        %v933 = vadd.f32 %v885, %v929
        %s934 = sld [smem:[#allocation3 + $0x76]]
        %v935 = vstv %s934
        %v936 = vmul.f32 %v935, %v865
        %v937 = vmul.f32 %v935, %v866
        %940 = vrot.lane.b32.xlu0 %v936, 127
        %v941 = vpop.permute.xlu0 %940
        %942 = vrot.lane.b32.xlu0 %v937, 127
        %v943 = vpop.permute.xlu0 %942
        %v946 = vadd.f32 %v890, %v941
        %v947 = vadd.f32 %v891, %v943
        %s948 = sld [smem:[#allocation3 + $0xb]]
        %v949 = vstv %s948
        %v950 = vmul.f32 %v949, %v865
        %v951 = vmul.f32 %v949, %v866
        %954 = vrot.lane.b32.xlu0 %v950, 126
        %v955 = vpop.permute.xlu0 %954
        %956 = vrot.lane.b32.xlu0 %v951, 126
        %v957 = vpop.permute.xlu0 %956
        %v960 = vadd.f32 %v904, %v955
        %v961 = vadd.f32 %v905, %v957
        %s962 = sld [smem:[#allocation3 + $0x2f]]
        %v963 = vstv %s962
        %v964 = vmul.f32 %v963, %v865
        %v965 = vmul.f32 %v963, %v866
        %968 = vrot.lane.b32.xlu0 %v964, 126
        %v969 = vpop.permute.xlu0 %968
        %970 = vrot.lane.b32.xlu0 %v965, 126
        %v971 = vpop.permute.xlu0 %970
        %v974 = vadd.f32 %v918, %v969
        %v975 = vadd.f32 %v919, %v971
        %s976 = sld [smem:[#allocation3 + $0x53]]
        %v977 = vstv %s976
        %v978 = vmul.f32 %v977, %v865
        %v979 = vmul.f32 %v977, %v866
        %982 = vrot.lane.b32.xlu0 %v978, 126
        %v983 = vpop.permute.xlu0 %982
        %984 = vrot.lane.b32.xlu0 %v979, 126
        %v985 = vpop.permute.xlu0 %984
        %v988 = vadd.f32 %v932, %v983
        %v989 = vadd.f32 %v933, %v985
        %s990 = sld [smem:[#allocation3 + $0x77]]
        %v991 = vstv %s990
        %v992 = vmul.f32 %v991, %v865
        %v993 = vmul.f32 %v991, %v866
        %996 = vrot.lane.b32.xlu0 %v992, 126
        %v997 = vpop.permute.xlu0 %996
        %998 = vrot.lane.b32.xlu0 %v993, 126
        %v999 = vpop.permute.xlu0 %998
        %v1002 = vadd.f32 %v946, %v997
        %v1003 = vadd.f32 %v947, %v999
        %s1004 = sld [smem:[#allocation3 + $0xc]]
        %v1005 = vstv %s1004
        %v1006 = vmul.f32 %v1005, %v865
        %v1007 = vmul.f32 %v1005, %v866
        %v1008 = vmul.f32 %v1005, %v867
        %v1012 = vrot.slane %v1006, 1
        %v1013 = vrot.slane %v1007, 1
        %v1014 = vsel %vm398, %v1012, %v1013
        %v1015 = vrot.slane %v1008, 1
        %v1016 = vsel %vm398, %v1013, %v1015
        %v1019 = vadd.f32 %v960, %v1014
        %v1020 = vadd.f32 %v961, %v1016
        %s1021 = sld [smem:[#allocation3 + $0x30]]
        %v1022 = vstv %s1021
        %v1023 = vmul.f32 %v1022, %v865
        %v1024 = vmul.f32 %v1022, %v866
        %v1025 = vmul.f32 %v1022, %v867
        %v1029 = vrot.slane %v1023, 1
        %v1030 = vrot.slane %v1024, 1
        %v1031 = vsel %vm398, %v1029, %v1030
        %v1032 = vrot.slane %v1025, 1
        %v1033 = vsel %vm398, %v1030, %v1032
        %v1036 = vadd.f32 %v974, %v1031
        %v1037 = vadd.f32 %v975, %v1033
        %s1038 = sld [smem:[#allocation3 + $0x54]]
        %v1039 = vstv %s1038
        %v1040 = vmul.f32 %v1039, %v865
        %v1041 = vmul.f32 %v1039, %v866
        %v1042 = vmul.f32 %v1039, %v867
        %v1046 = vrot.slane %v1040, 1
        %v1047 = vrot.slane %v1041, 1
        %v1048 = vsel %vm398, %v1046, %v1047
        %v1049 = vrot.slane %v1042, 1
        %v1050 = vsel %vm398, %v1047, %v1049
        %v1053 = vadd.f32 %v988, %v1048
        %v1054 = vadd.f32 %v989, %v1050
        %s1055 = sld [smem:[#allocation3 + $0x78]]
        %v1056 = vstv %s1055
        %v1057 = vmul.f32 %v1056, %v865
        %v1058 = vmul.f32 %v1056, %v866
        %v1059 = vmul.f32 %v1056, %v867
        %v1063 = vrot.slane %v1057, 1
        %v1064 = vrot.slane %v1058, 1
        %v1065 = vsel %vm398, %v1063, %v1064
        %v1066 = vrot.slane %v1059, 1
        %v1067 = vsel %vm398, %v1064, %v1066
        %v1070 = vadd.f32 %v1002, %v1065
        %v1071 = vadd.f32 %v1003, %v1067
        %s1072 = sld [smem:[#allocation3 + $0xd]]
        %v1073 = vstv %s1072
        %v1074 = vmul.f32 %v1073, %v865
        %v1075 = vmul.f32 %v1073, %v866
        %v1076 = vmul.f32 %v1073, %v867
        %v1080 = vrot.slane %v1074, 1
        %v1081 = vrot.slane %v1075, 1
        %v1082 = vsel %vm398, %v1080, %v1081
        %v1083 = vrot.slane %v1076, 1
        %v1084 = vsel %vm398, %v1081, %v1083
        %1085 = vrot.lane.b32.xlu0 %v1082, 127
        %v1086 = vpop.permute.xlu0 %1085
        %1087 = vrot.lane.b32.xlu0 %v1084, 127
        %v1088 = vpop.permute.xlu0 %1087
        %v1091 = vadd.f32 %v1019, %v1086
        %v1092 = vadd.f32 %v1020, %v1088
        %s1093 = sld [smem:[#allocation3 + $0x31]]
        %v1094 = vstv %s1093
        %v1095 = vmul.f32 %v1094, %v865
        %v1096 = vmul.f32 %v1094, %v866
        %v1097 = vmul.f32 %v1094, %v867
        %v1101 = vrot.slane %v1095, 1
        %v1102 = vrot.slane %v1096, 1
        %v1103 = vsel %vm398, %v1101, %v1102
        %v1104 = vrot.slane %v1097, 1
        %v1105 = vsel %vm398, %v1102, %v1104
        %1106 = vrot.lane.b32.xlu0 %v1103, 127
        %v1107 = vpop.permute.xlu0 %1106
        %1108 = vrot.lane.b32.xlu0 %v1105, 127
        %v1109 = vpop.permute.xlu0 %1108
        %v1112 = vadd.f32 %v1036, %v1107
        %v1113 = vadd.f32 %v1037, %v1109
        %s1114 = sld [smem:[#allocation3 + $0x55]]
        %v1115 = vstv %s1114
        %v1116 = vmul.f32 %v1115, %v865
        %v1117 = vmul.f32 %v1115, %v866
        %v1118 = vmul.f32 %v1115, %v867
        %v1122 = vrot.slane %v1116, 1
        %v1123 = vrot.slane %v1117, 1
        %v1124 = vsel %vm398, %v1122, %v1123
        %v1125 = vrot.slane %v1118, 1
        %v1126 = vsel %vm398, %v1123, %v1125
        %1127 = vrot.lane.b32.xlu0 %v1124, 127
        %v1128 = vpop.permute.xlu0 %1127
        %1129 = vrot.lane.b32.xlu0 %v1126, 127
        %v1130 = vpop.permute.xlu0 %1129
        %v1133 = vadd.f32 %v1053, %v1128
        %v1134 = vadd.f32 %v1054, %v1130
        %s1135 = sld [smem:[#allocation3 + $0x79]]
        %v1136 = vstv %s1135
        %v1137 = vmul.f32 %v1136, %v865
        %v1138 = vmul.f32 %v1136, %v866
        %v1139 = vmul.f32 %v1136, %v867
        %v1143 = vrot.slane %v1137, 1
        %v1144 = vrot.slane %v1138, 1
        %v1145 = vsel %vm398, %v1143, %v1144
        %v1146 = vrot.slane %v1139, 1
        %v1147 = vsel %vm398, %v1144, %v1146
        %1148 = vrot.lane.b32.xlu0 %v1145, 127
        %v1149 = vpop.permute.xlu0 %1148
        %1150 = vrot.lane.b32.xlu0 %v1147, 127
        %v1151 = vpop.permute.xlu0 %1150
        %v1154 = vadd.f32 %v1070, %v1149
        %v1155 = vadd.f32 %v1071, %v1151
        %s1156 = sld [smem:[#allocation3 + $0xe]]
        %v1157 = vstv %s1156
        %v1158 = vmul.f32 %v1157, %v865
        %v1159 = vmul.f32 %v1157, %v866
        %v1160 = vmul.f32 %v1157, %v867
        %v1164 = vrot.slane %v1158, 1
        %v1165 = vrot.slane %v1159, 1
        %v1166 = vsel %vm398, %v1164, %v1165
        %v1167 = vrot.slane %v1160, 1
        %v1168 = vsel %vm398, %v1165, %v1167
        %1169 = vrot.lane.b32.xlu0 %v1166, 126
        %v1170 = vpop.permute.xlu0 %1169
        %1171 = vrot.lane.b32.xlu0 %v1168, 126
        %v1172 = vpop.permute.xlu0 %1171
        %v1175 = vadd.f32 %v1091, %v1170
        %v1176 = vadd.f32 %v1092, %v1172
        %s1177 = sld [smem:[#allocation3 + $0x32]]
        %v1178 = vstv %s1177
        %v1179 = vmul.f32 %v1178, %v865
        %v1180 = vmul.f32 %v1178, %v866
        %v1181 = vmul.f32 %v1178, %v867
        %v1185 = vrot.slane %v1179, 1
        %v1186 = vrot.slane %v1180, 1
        %v1187 = vsel %vm398, %v1185, %v1186
        %v1188 = vrot.slane %v1181, 1
        %v1189 = vsel %vm398, %v1186, %v1188
        %1190 = vrot.lane.b32.xlu0 %v1187, 126
        %v1191 = vpop.permute.xlu0 %1190
        %1192 = vrot.lane.b32.xlu0 %v1189, 126
        %v1193 = vpop.permute.xlu0 %1192
        %v1196 = vadd.f32 %v1112, %v1191
        %v1197 = vadd.f32 %v1113, %v1193
        %s1198 = sld [smem:[#allocation3 + $0x56]]
        %v1199 = vstv %s1198
        %v1200 = vmul.f32 %v1199, %v865
        %v1201 = vmul.f32 %v1199, %v866
        %v1202 = vmul.f32 %v1199, %v867
        %v1206 = vrot.slane %v1200, 1
        %v1207 = vrot.slane %v1201, 1
        %v1208 = vsel %vm398, %v1206, %v1207
        %v1209 = vrot.slane %v1202, 1
        %v1210 = vsel %vm398, %v1207, %v1209
        %1211 = vrot.lane.b32.xlu0 %v1208, 126
        %v1212 = vpop.permute.xlu0 %1211
        %1213 = vrot.lane.b32.xlu0 %v1210, 126
        %v1214 = vpop.permute.xlu0 %1213
        %v1217 = vadd.f32 %v1133, %v1212
        %v1218 = vadd.f32 %v1134, %v1214
        %s1219 = sld [smem:[#allocation3 + $0x7a]]
        %v1220 = vstv %s1219
        %v1221 = vmul.f32 %v1220, %v865
        %v1222 = vmul.f32 %v1220, %v866
        %v1223 = vmul.f32 %v1220, %v867
        %v1227 = vrot.slane %v1221, 1
        %v1228 = vrot.slane %v1222, 1
        %v1229 = vsel %vm398, %v1227, %v1228
        %v1230 = vrot.slane %v1223, 1
        %v1231 = vsel %vm398, %v1228, %v1230
        %1232 = vrot.lane.b32.xlu0 %v1229, 126
        %v1233 = vpop.permute.xlu0 %1232
        %1234 = vrot.lane.b32.xlu0 %v1231, 126
        %v1235 = vpop.permute.xlu0 %1234
        %v1238 = vadd.f32 %v1154, %v1233
        %v1239 = vadd.f32 %v1155, %v1235
        %s1240 = sld [smem:[#allocation3 + $0xf]]
        %v1241 = vstv %s1240
        %v1242 = vmul.f32 %v1241, %v865
        %v1243 = vmul.f32 %v1241, %v866
        %v1244 = vmul.f32 %v1241, %v867
        %v1248 = vrot.slane %v1242, 2
        %v1249 = vrot.slane %v1243, 2
        %v1250 = vsel %vm635, %v1248, %v1249
        %v1251 = vrot.slane %v1244, 2
        %v1252 = vsel %vm635, %v1249, %v1251
        %v1255 = vadd.f32 %v1175, %v1250
        %v1256 = vadd.f32 %v1176, %v1252
        %s1257 = sld [smem:[#allocation3 + $0x33]]
        %v1258 = vstv %s1257
        %v1259 = vmul.f32 %v1258, %v865
        %v1260 = vmul.f32 %v1258, %v866
        %v1261 = vmul.f32 %v1258, %v867
        %v1265 = vrot.slane %v1259, 2
        %v1266 = vrot.slane %v1260, 2
        %v1267 = vsel %vm635, %v1265, %v1266
        %v1268 = vrot.slane %v1261, 2
        %v1269 = vsel %vm635, %v1266, %v1268
        %v1272 = vadd.f32 %v1196, %v1267
        %v1273 = vadd.f32 %v1197, %v1269
        %s1274 = sld [smem:[#allocation3 + $0x57]]
        %v1275 = vstv %s1274
        %v1276 = vmul.f32 %v1275, %v865
        %v1277 = vmul.f32 %v1275, %v866
        %v1278 = vmul.f32 %v1275, %v867
        %v1282 = vrot.slane %v1276, 2
        %v1283 = vrot.slane %v1277, 2
        %v1284 = vsel %vm635, %v1282, %v1283
        %v1285 = vrot.slane %v1278, 2
        %v1286 = vsel %vm635, %v1283, %v1285
        %v1289 = vadd.f32 %v1217, %v1284
        %v1290 = vadd.f32 %v1218, %v1286
        %s1291 = sld [smem:[#allocation3 + $0x7b]]
        %v1292 = vstv %s1291
        %v1293 = vmul.f32 %v1292, %v865
        %v1294 = vmul.f32 %v1292, %v866
        %v1295 = vmul.f32 %v1292, %v867
        %v1299 = vrot.slane %v1293, 2
        %v1300 = vrot.slane %v1294, 2
        %v1301 = vsel %vm635, %v1299, %v1300
        %v1302 = vrot.slane %v1295, 2
        %v1303 = vsel %vm635, %v1300, %v1302
        %v1306 = vadd.f32 %v1238, %v1301
        %v1307 = vadd.f32 %v1239, %v1303
        %s1308 = sld [smem:[#allocation3 + $0x10]]
        %v1309 = vstv %s1308
        %v1310 = vmul.f32 %v1309, %v865
        %v1311 = vmul.f32 %v1309, %v866
        %v1312 = vmul.f32 %v1309, %v867
        %v1316 = vrot.slane %v1310, 2
        %v1317 = vrot.slane %v1311, 2
        %v1318 = vsel %vm635, %v1316, %v1317
        %v1319 = vrot.slane %v1312, 2
        %v1320 = vsel %vm635, %v1317, %v1319
        %1321 = vrot.lane.b32.xlu0 %v1318, 127
        %v1322 = vpop.permute.xlu0 %1321
        %1323 = vrot.lane.b32.xlu0 %v1320, 127
        %v1324 = vpop.permute.xlu0 %1323
        %v1327 = vadd.f32 %v1255, %v1322
        %v1328 = vadd.f32 %v1256, %v1324
        %s1329 = sld [smem:[#allocation3 + $0x34]]
        %v1330 = vstv %s1329
        %v1331 = vmul.f32 %v1330, %v865
        %v1332 = vmul.f32 %v1330, %v866
        %v1333 = vmul.f32 %v1330, %v867
        %v1337 = vrot.slane %v1331, 2
        %v1338 = vrot.slane %v1332, 2
        %v1339 = vsel %vm635, %v1337, %v1338
        %v1340 = vrot.slane %v1333, 2
        %v1341 = vsel %vm635, %v1338, %v1340
        %1342 = vrot.lane.b32.xlu0 %v1339, 127
        %v1343 = vpop.permute.xlu0 %1342
        %1344 = vrot.lane.b32.xlu0 %v1341, 127
        %v1345 = vpop.permute.xlu0 %1344
        %v1348 = vadd.f32 %v1272, %v1343
        %v1349 = vadd.f32 %v1273, %v1345
        %s1350 = sld [smem:[#allocation3 + $0x58]]
        %v1351 = vstv %s1350
        %v1352 = vmul.f32 %v1351, %v865
        %v1353 = vmul.f32 %v1351, %v866
        %v1354 = vmul.f32 %v1351, %v867
        %v1358 = vrot.slane %v1352, 2
        %v1359 = vrot.slane %v1353, 2
        %v1360 = vsel %vm635, %v1358, %v1359
        %v1361 = vrot.slane %v1354, 2
        %v1362 = vsel %vm635, %v1359, %v1361
        %1363 = vrot.lane.b32.xlu0 %v1360, 127
        %v1364 = vpop.permute.xlu0 %1363
        %1365 = vrot.lane.b32.xlu0 %v1362, 127
        %v1366 = vpop.permute.xlu0 %1365
        %v1369 = vadd.f32 %v1289, %v1364
        %v1370 = vadd.f32 %v1290, %v1366
        %s1371 = sld [smem:[#allocation3 + $0x7c]]
        %v1372 = vstv %s1371
        %v1373 = vmul.f32 %v1372, %v865
        %v1374 = vmul.f32 %v1372, %v866
        %v1375 = vmul.f32 %v1372, %v867
        %v1379 = vrot.slane %v1373, 2
        %v1380 = vrot.slane %v1374, 2
        %v1381 = vsel %vm635, %v1379, %v1380
        %v1382 = vrot.slane %v1375, 2
        %v1383 = vsel %vm635, %v1380, %v1382
        %1384 = vrot.lane.b32.xlu0 %v1381, 127
        %v1385 = vpop.permute.xlu0 %1384
        %1386 = vrot.lane.b32.xlu0 %v1383, 127
        %v1387 = vpop.permute.xlu0 %1386
        %v1390 = vadd.f32 %v1306, %v1385
        %v1391 = vadd.f32 %v1307, %v1387
        %s1392 = sld [smem:[#allocation3 + $0x11]]
        %v1393 = vstv %s1392
        %v1394 = vmul.f32 %v1393, %v865
        %v1395 = vmul.f32 %v1393, %v866
        %v1396 = vmul.f32 %v1393, %v867
        %v1400 = vrot.slane %v1394, 2
        %v1401 = vrot.slane %v1395, 2
        %v1402 = vsel %vm635, %v1400, %v1401
        %v1403 = vrot.slane %v1396, 2
        %v1404 = vsel %vm635, %v1401, %v1403
        %1405 = vrot.lane.b32.xlu0 %v1402, 126
        %v1406 = vpop.permute.xlu0 %1405
        %1407 = vrot.lane.b32.xlu0 %v1404, 126
        %v1408 = vpop.permute.xlu0 %1407
        %v1411 = vadd.f32 %v1327, %v1406
        %v1412 = vadd.f32 %v1328, %v1408
        %s1413 = sld [smem:[#allocation3 + $0x35]]
        %v1414 = vstv %s1413
        %v1415 = vmul.f32 %v1414, %v865
        %v1416 = vmul.f32 %v1414, %v866
        %v1417 = vmul.f32 %v1414, %v867
        %v1421 = vrot.slane %v1415, 2
        %v1422 = vrot.slane %v1416, 2
        %v1423 = vsel %vm635, %v1421, %v1422
        %v1424 = vrot.slane %v1417, 2
        %v1425 = vsel %vm635, %v1422, %v1424
        %1426 = vrot.lane.b32.xlu0 %v1423, 126
        %v1427 = vpop.permute.xlu0 %1426
        %1428 = vrot.lane.b32.xlu0 %v1425, 126
        %v1429 = vpop.permute.xlu0 %1428
        %v1432 = vadd.f32 %v1348, %v1427
        %v1433 = vadd.f32 %v1349, %v1429
        %s1434 = sld [smem:[#allocation3 + $0x59]]
        %v1435 = vstv %s1434
        %v1436 = vmul.f32 %v1435, %v865
        %v1437 = vmul.f32 %v1435, %v866
        %v1438 = vmul.f32 %v1435, %v867
        %v1442 = vrot.slane %v1436, 2
        %v1443 = vrot.slane %v1437, 2
        %v1444 = vsel %vm635, %v1442, %v1443
        %v1445 = vrot.slane %v1438, 2
        %v1446 = vsel %vm635, %v1443, %v1445
        %1447 = vrot.lane.b32.xlu0 %v1444, 126
        %v1448 = vpop.permute.xlu0 %1447
        %1449 = vrot.lane.b32.xlu0 %v1446, 126
        %v1450 = vpop.permute.xlu0 %1449
        %v1453 = vadd.f32 %v1369, %v1448
        %v1454 = vadd.f32 %v1370, %v1450
        %s1455 = sld [smem:[#allocation3 + $0x7d]]
        %v1456 = vstv %s1455
        %v1457 = vmul.f32 %v1456, %v865
        %v1458 = vmul.f32 %v1456, %v866
        %v1459 = vmul.f32 %v1456, %v867
        %v1463 = vrot.slane %v1457, 2
        %v1464 = vrot.slane %v1458, 2
        %v1465 = vsel %vm635, %v1463, %v1464
        %v1466 = vrot.slane %v1459, 2
        %v1467 = vsel %vm635, %v1464, %v1466
        %1468 = vrot.lane.b32.xlu0 %v1465, 126
        %v1469 = vpop.permute.xlu0 %1468
        %1470 = vrot.lane.b32.xlu0 %v1467, 126
        %v1471 = vpop.permute.xlu0 %1470
        %v1474 = vadd.f32 %v1390, %v1469
        %v1475 = vadd.f32 %v1391, %v1471
        %s1476 = scalar_lea.vmem [#allocation2], 48
        %v1477 = vld [vmem:[%s1476] sm:$0xff]
        %v1478 = vld [vmem:[%s1476 + $0x8] sm:$0xff]
        %v1479 = vld [vmem:[%s1476 + $0x10] sm:$0x3]
        %s1480 = sld [smem:[#allocation3 + $0x12]]
        %v1481 = vstv %s1480
        %v1482 = vmul.f32 %v1481, %v1477
        %v1483 = vmul.f32 %v1481, %v1478
        %v1484 = vadd.f32 %v1411, %v1482
        %v1485 = vadd.f32 %v1412, %v1483
        %s1486 = sld [smem:[#allocation3 + $0x36]]
        %v1487 = vstv %s1486
        %v1488 = vmul.f32 %v1487, %v1477
        %v1489 = vmul.f32 %v1487, %v1478
        %v1490 = vadd.f32 %v1432, %v1488
        %v1491 = vadd.f32 %v1433, %v1489
        %s1492 = sld [smem:[#allocation3 + $0x5a]]
        %v1493 = vstv %s1492
        %v1494 = vmul.f32 %v1493, %v1477
        %v1495 = vmul.f32 %v1493, %v1478
        %v1496 = vadd.f32 %v1453, %v1494
        %v1497 = vadd.f32 %v1454, %v1495
        %s1498 = sld [smem:[#allocation3 + $0x7e]]
        %v1499 = vstv %s1498
        %v1500 = vmul.f32 %v1499, %v1477
        %v1501 = vmul.f32 %v1499, %v1478
        %v1502 = vadd.f32 %v1474, %v1500
        %v1503 = vadd.f32 %v1475, %v1501
        %s1504 = sld [smem:[#allocation3 + $0x13]]
        %v1505 = vstv %s1504
        %v1506 = vmul.f32 %v1505, %v1477
        %v1507 = vmul.f32 %v1505, %v1478
        %1510 = vrot.lane.b32.xlu0 %v1506, 127
        %v1511 = vpop.permute.xlu0 %1510
        %1512 = vrot.lane.b32.xlu0 %v1507, 127
        %v1513 = vpop.permute.xlu0 %1512
        %v1516 = vadd.f32 %v1484, %v1511
        %v1517 = vadd.f32 %v1485, %v1513
        %s1518 = sld [smem:[#allocation3 + $0x37]]
        %v1519 = vstv %s1518
        %v1520 = vmul.f32 %v1519, %v1477
        %v1521 = vmul.f32 %v1519, %v1478
        %1524 = vrot.lane.b32.xlu0 %v1520, 127
        %v1525 = vpop.permute.xlu0 %1524
        %1526 = vrot.lane.b32.xlu0 %v1521, 127
        %v1527 = vpop.permute.xlu0 %1526
        %v1530 = vadd.f32 %v1490, %v1525
        %v1531 = vadd.f32 %v1491, %v1527
        %s1532 = sld [smem:[#allocation3 + $0x5b]]
        %v1533 = vstv %s1532
        %v1534 = vmul.f32 %v1533, %v1477
        %v1535 = vmul.f32 %v1533, %v1478
        %1538 = vrot.lane.b32.xlu0 %v1534, 127
        %v1539 = vpop.permute.xlu0 %1538
        %1540 = vrot.lane.b32.xlu0 %v1535, 127
        %v1541 = vpop.permute.xlu0 %1540
        %v1544 = vadd.f32 %v1496, %v1539
        %v1545 = vadd.f32 %v1497, %v1541
        %s1546 = sld [smem:[#allocation3 + $0x7f]]
        %v1547 = vstv %s1546
        %v1548 = vmul.f32 %v1547, %v1477
        %v1549 = vmul.f32 %v1547, %v1478
        %1552 = vrot.lane.b32.xlu0 %v1548, 127
        %v1553 = vpop.permute.xlu0 %1552
        %1554 = vrot.lane.b32.xlu0 %v1549, 127
        %v1555 = vpop.permute.xlu0 %1554
        %v1558 = vadd.f32 %v1502, %v1553
        %v1559 = vadd.f32 %v1503, %v1555
        %s1560 = sld [smem:[#allocation3 + $0x14]]
        %v1561 = vstv %s1560
        %v1562 = vmul.f32 %v1561, %v1477
        %v1563 = vmul.f32 %v1561, %v1478
        %1566 = vrot.lane.b32.xlu0 %v1562, 126
        %v1567 = vpop.permute.xlu0 %1566
        %1568 = vrot.lane.b32.xlu0 %v1563, 126
        %v1569 = vpop.permute.xlu0 %1568
        %v1572 = vadd.f32 %v1516, %v1567
        %v1573 = vadd.f32 %v1517, %v1569
        %s1574 = sld [smem:[#allocation3 + $0x38]]
        %v1575 = vstv %s1574
        %v1576 = vmul.f32 %v1575, %v1477
        %v1577 = vmul.f32 %v1575, %v1478
        %1580 = vrot.lane.b32.xlu0 %v1576, 126
        %v1581 = vpop.permute.xlu0 %1580
        %1582 = vrot.lane.b32.xlu0 %v1577, 126
        %v1583 = vpop.permute.xlu0 %1582
        %v1586 = vadd.f32 %v1530, %v1581
        %v1587 = vadd.f32 %v1531, %v1583
        %s1588 = sld [smem:[#allocation3 + $0x5c]]
        %v1589 = vstv %s1588
        %v1590 = vmul.f32 %v1589, %v1477
        %v1591 = vmul.f32 %v1589, %v1478
        %1594 = vrot.lane.b32.xlu0 %v1590, 126
        %v1595 = vpop.permute.xlu0 %1594
        %1596 = vrot.lane.b32.xlu0 %v1591, 126
        %v1597 = vpop.permute.xlu0 %1596
        %v1600 = vadd.f32 %v1544, %v1595
        %v1601 = vadd.f32 %v1545, %v1597
        %s1602 = sld [smem:[#allocation3 + $0x80]]
        %v1603 = vstv %s1602
        %v1604 = vmul.f32 %v1603, %v1477
        %v1605 = vmul.f32 %v1603, %v1478
        %1608 = vrot.lane.b32.xlu0 %v1604, 126
        %v1609 = vpop.permute.xlu0 %1608
        %1610 = vrot.lane.b32.xlu0 %v1605, 126
        %v1611 = vpop.permute.xlu0 %1610
        %v1614 = vadd.f32 %v1558, %v1609
        %v1615 = vadd.f32 %v1559, %v1611
        %s1616 = sld [smem:[#allocation3 + $0x15]]
        %v1617 = vstv %s1616
        %v1618 = vmul.f32 %v1617, %v1477
        %v1619 = vmul.f32 %v1617, %v1478
        %v1620 = vmul.f32 %v1617, %v1479
        %v1624 = vrot.slane %v1618, 1
        %v1625 = vrot.slane %v1619, 1
        %v1626 = vsel %vm398, %v1624, %v1625
        %v1627 = vrot.slane %v1620, 1
        %v1628 = vsel %vm398, %v1625, %v1627
        %v1631 = vadd.f32 %v1572, %v1626
        %v1632 = vadd.f32 %v1573, %v1628
        %s1633 = sld [smem:[#allocation3 + $0x39]]
        %v1634 = vstv %s1633
        %v1635 = vmul.f32 %v1634, %v1477
        %v1636 = vmul.f32 %v1634, %v1478
        %v1637 = vmul.f32 %v1634, %v1479
        %v1641 = vrot.slane %v1635, 1
        %v1642 = vrot.slane %v1636, 1
        %v1643 = vsel %vm398, %v1641, %v1642
        %v1644 = vrot.slane %v1637, 1
        %v1645 = vsel %vm398, %v1642, %v1644
        %v1648 = vadd.f32 %v1586, %v1643
        %v1649 = vadd.f32 %v1587, %v1645
        %s1650 = sld [smem:[#allocation3 + $0x5d]]
        %v1651 = vstv %s1650
        %v1652 = vmul.f32 %v1651, %v1477
        %v1653 = vmul.f32 %v1651, %v1478
        %v1654 = vmul.f32 %v1651, %v1479
        %v1658 = vrot.slane %v1652, 1
        %v1659 = vrot.slane %v1653, 1
        %v1660 = vsel %vm398, %v1658, %v1659
        %v1661 = vrot.slane %v1654, 1
        %v1662 = vsel %vm398, %v1659, %v1661
        %v1665 = vadd.f32 %v1600, %v1660
        %v1666 = vadd.f32 %v1601, %v1662
        %s1667 = sld [smem:[#allocation3 + $0x81]]
        %v1668 = vstv %s1667
        %v1669 = vmul.f32 %v1668, %v1477
        %v1670 = vmul.f32 %v1668, %v1478
        %v1671 = vmul.f32 %v1668, %v1479
        %v1675 = vrot.slane %v1669, 1
        %v1676 = vrot.slane %v1670, 1
        %v1677 = vsel %vm398, %v1675, %v1676
        %v1678 = vrot.slane %v1671, 1
        %v1679 = vsel %vm398, %v1676, %v1678
        %v1682 = vadd.f32 %v1614, %v1677
        %v1683 = vadd.f32 %v1615, %v1679
        %s1684 = sld [smem:[#allocation3 + $0x16]]
        %v1685 = vstv %s1684
        %v1686 = vmul.f32 %v1685, %v1477
        %v1687 = vmul.f32 %v1685, %v1478
        %v1688 = vmul.f32 %v1685, %v1479
        %v1692 = vrot.slane %v1686, 1
        %v1693 = vrot.slane %v1687, 1
        %v1694 = vsel %vm398, %v1692, %v1693
        %v1695 = vrot.slane %v1688, 1
        %v1696 = vsel %vm398, %v1693, %v1695
        %1697 = vrot.lane.b32.xlu0 %v1694, 127
        %v1698 = vpop.permute.xlu0 %1697
        %1699 = vrot.lane.b32.xlu0 %v1696, 127
        %v1700 = vpop.permute.xlu0 %1699
        %v1703 = vadd.f32 %v1631, %v1698
        %v1704 = vadd.f32 %v1632, %v1700
        %s1705 = sld [smem:[#allocation3 + $0x3a]]
        %v1706 = vstv %s1705
        %v1707 = vmul.f32 %v1706, %v1477
        %v1708 = vmul.f32 %v1706, %v1478
        %v1709 = vmul.f32 %v1706, %v1479
        %v1713 = vrot.slane %v1707, 1
        %v1714 = vrot.slane %v1708, 1
        %v1715 = vsel %vm398, %v1713, %v1714
        %v1716 = vrot.slane %v1709, 1
        %v1717 = vsel %vm398, %v1714, %v1716
        %1718 = vrot.lane.b32.xlu0 %v1715, 127
        %v1719 = vpop.permute.xlu0 %1718
        %1720 = vrot.lane.b32.xlu0 %v1717, 127
        %v1721 = vpop.permute.xlu0 %1720
        %v1724 = vadd.f32 %v1648, %v1719
        %v1725 = vadd.f32 %v1649, %v1721
        %s1726 = sld [smem:[#allocation3 + $0x5e]]
        %v1727 = vstv %s1726
        %v1728 = vmul.f32 %v1727, %v1477
        %v1729 = vmul.f32 %v1727, %v1478
        %v1730 = vmul.f32 %v1727, %v1479
        %v1734 = vrot.slane %v1728, 1
        %v1735 = vrot.slane %v1729, 1
        %v1736 = vsel %vm398, %v1734, %v1735
        %v1737 = vrot.slane %v1730, 1
        %v1738 = vsel %vm398, %v1735, %v1737
        %1739 = vrot.lane.b32.xlu0 %v1736, 127
        %v1740 = vpop.permute.xlu0 %1739
        %1741 = vrot.lane.b32.xlu0 %v1738, 127
        %v1742 = vpop.permute.xlu0 %1741
        %v1745 = vadd.f32 %v1665, %v1740
        %v1746 = vadd.f32 %v1666, %v1742
        %s1747 = sld [smem:[#allocation3 + $0x82]]
        %v1748 = vstv %s1747
        %v1749 = vmul.f32 %v1748, %v1477
        %v1750 = vmul.f32 %v1748, %v1478
        %v1751 = vmul.f32 %v1748, %v1479
        %v1755 = vrot.slane %v1749, 1
        %v1756 = vrot.slane %v1750, 1
        %v1757 = vsel %vm398, %v1755, %v1756
        %v1758 = vrot.slane %v1751, 1
        %v1759 = vsel %vm398, %v1756, %v1758
        %1760 = vrot.lane.b32.xlu0 %v1757, 127
        %v1761 = vpop.permute.xlu0 %1760
        %1762 = vrot.lane.b32.xlu0 %v1759, 127
        %v1763 = vpop.permute.xlu0 %1762
        %v1766 = vadd.f32 %v1682, %v1761
        %v1767 = vadd.f32 %v1683, %v1763
        %s1768 = sld [smem:[#allocation3 + $0x17]]
        %v1769 = vstv %s1768
        %v1770 = vmul.f32 %v1769, %v1477
        %v1771 = vmul.f32 %v1769, %v1478
        %v1772 = vmul.f32 %v1769, %v1479
        %v1776 = vrot.slane %v1770, 1
        %v1777 = vrot.slane %v1771, 1
        %v1778 = vsel %vm398, %v1776, %v1777
        %v1779 = vrot.slane %v1772, 1
        %v1780 = vsel %vm398, %v1777, %v1779
        %1781 = vrot.lane.b32.xlu0 %v1778, 126
        %v1782 = vpop.permute.xlu0 %1781
        %1783 = vrot.lane.b32.xlu0 %v1780, 126
        %v1784 = vpop.permute.xlu0 %1783
        %v1787 = vadd.f32 %v1703, %v1782
        %v1788 = vadd.f32 %v1704, %v1784
        %s1789 = sld [smem:[#allocation3 + $0x3b]]
        %v1790 = vstv %s1789
        %v1791 = vmul.f32 %v1790, %v1477
        %v1792 = vmul.f32 %v1790, %v1478
        %v1793 = vmul.f32 %v1790, %v1479
        %v1797 = vrot.slane %v1791, 1
        %v1798 = vrot.slane %v1792, 1
        %v1799 = vsel %vm398, %v1797, %v1798
        %v1800 = vrot.slane %v1793, 1
        %v1801 = vsel %vm398, %v1798, %v1800
        %1802 = vrot.lane.b32.xlu0 %v1799, 126
        %v1803 = vpop.permute.xlu0 %1802
        %1804 = vrot.lane.b32.xlu0 %v1801, 126
        %v1805 = vpop.permute.xlu0 %1804
        %v1808 = vadd.f32 %v1724, %v1803
        %v1809 = vadd.f32 %v1725, %v1805
        %s1810 = sld [smem:[#allocation3 + $0x5f]]
        %v1811 = vstv %s1810
        %v1812 = vmul.f32 %v1811, %v1477
        %v1813 = vmul.f32 %v1811, %v1478
        %v1814 = vmul.f32 %v1811, %v1479
        %v1818 = vrot.slane %v1812, 1
        %v1819 = vrot.slane %v1813, 1
        %v1820 = vsel %vm398, %v1818, %v1819
        %v1821 = vrot.slane %v1814, 1
        %v1822 = vsel %vm398, %v1819, %v1821
        %1823 = vrot.lane.b32.xlu0 %v1820, 126
        %v1824 = vpop.permute.xlu0 %1823
        %1825 = vrot.lane.b32.xlu0 %v1822, 126
        %v1826 = vpop.permute.xlu0 %1825
        %v1829 = vadd.f32 %v1745, %v1824
        %v1830 = vadd.f32 %v1746, %v1826
        %s1831 = sld [smem:[#allocation3 + $0x83]]
        %v1832 = vstv %s1831
        %v1833 = vmul.f32 %v1832, %v1477
        %v1834 = vmul.f32 %v1832, %v1478
        %v1835 = vmul.f32 %v1832, %v1479
        %v1839 = vrot.slane %v1833, 1
        %v1840 = vrot.slane %v1834, 1
        %v1841 = vsel %vm398, %v1839, %v1840
        %v1842 = vrot.slane %v1835, 1
        %v1843 = vsel %vm398, %v1840, %v1842
        %1844 = vrot.lane.b32.xlu0 %v1841, 126
        %v1845 = vpop.permute.xlu0 %1844
        %1846 = vrot.lane.b32.xlu0 %v1843, 126
        %v1847 = vpop.permute.xlu0 %1846
        %v1850 = vadd.f32 %v1766, %v1845
        %v1851 = vadd.f32 %v1767, %v1847
        %s1852 = sld [smem:[#allocation3 + $0x18]]
        %v1853 = vstv %s1852
        %v1854 = vmul.f32 %v1853, %v1477
        %v1855 = vmul.f32 %v1853, %v1478
        %v1856 = vmul.f32 %v1853, %v1479
        %v1860 = vrot.slane %v1854, 2
        %v1861 = vrot.slane %v1855, 2
        %v1862 = vsel %vm635, %v1860, %v1861
        %v1863 = vrot.slane %v1856, 2
        %v1864 = vsel %vm635, %v1861, %v1863
        %v1867 = vadd.f32 %v1787, %v1862
        %v1868 = vadd.f32 %v1788, %v1864
        %s1869 = sld [smem:[#allocation3 + $0x3c]]
        %v1870 = vstv %s1869
        %v1871 = vmul.f32 %v1870, %v1477
        %v1872 = vmul.f32 %v1870, %v1478
        %v1873 = vmul.f32 %v1870, %v1479
        %v1877 = vrot.slane %v1871, 2
        %v1878 = vrot.slane %v1872, 2
        %v1879 = vsel %vm635, %v1877, %v1878
        %v1880 = vrot.slane %v1873, 2
        %v1881 = vsel %vm635, %v1878, %v1880
        %v1884 = vadd.f32 %v1808, %v1879
        %v1885 = vadd.f32 %v1809, %v1881
        %s1886 = sld [smem:[#allocation3 + $0x60]]
        %v1887 = vstv %s1886
        %v1888 = vmul.f32 %v1887, %v1477
        %v1889 = vmul.f32 %v1887, %v1478
        %v1890 = vmul.f32 %v1887, %v1479
        %v1894 = vrot.slane %v1888, 2
        %v1895 = vrot.slane %v1889, 2
        %v1896 = vsel %vm635, %v1894, %v1895
        %v1897 = vrot.slane %v1890, 2
        %v1898 = vsel %vm635, %v1895, %v1897
        %v1901 = vadd.f32 %v1829, %v1896
        %v1902 = vadd.f32 %v1830, %v1898
        %s1903 = sld [smem:[#allocation3 + $0x84]]
        %v1904 = vstv %s1903
        %v1905 = vmul.f32 %v1904, %v1477
        %v1906 = vmul.f32 %v1904, %v1478
        %v1907 = vmul.f32 %v1904, %v1479
        %v1911 = vrot.slane %v1905, 2
        %v1912 = vrot.slane %v1906, 2
        %v1913 = vsel %vm635, %v1911, %v1912
        %v1914 = vrot.slane %v1907, 2
        %v1915 = vsel %vm635, %v1912, %v1914
        %v1918 = vadd.f32 %v1850, %v1913
        %v1919 = vadd.f32 %v1851, %v1915
        %s1920 = sld [smem:[#allocation3 + $0x19]]
        %v1921 = vstv %s1920
        %v1922 = vmul.f32 %v1921, %v1477
        %v1923 = vmul.f32 %v1921, %v1478
        %v1924 = vmul.f32 %v1921, %v1479
        %v1928 = vrot.slane %v1922, 2
        %v1929 = vrot.slane %v1923, 2
        %v1930 = vsel %vm635, %v1928, %v1929
        %v1931 = vrot.slane %v1924, 2
        %v1932 = vsel %vm635, %v1929, %v1931
        %1933 = vrot.lane.b32.xlu0 %v1930, 127
        %v1934 = vpop.permute.xlu0 %1933
        %1935 = vrot.lane.b32.xlu0 %v1932, 127
        %v1936 = vpop.permute.xlu0 %1935
        %v1939 = vadd.f32 %v1867, %v1934
        %v1940 = vadd.f32 %v1868, %v1936
        %s1941 = sld [smem:[#allocation3 + $0x3d]]
        %v1942 = vstv %s1941
        %v1943 = vmul.f32 %v1942, %v1477
        %v1944 = vmul.f32 %v1942, %v1478
        %v1945 = vmul.f32 %v1942, %v1479
        %v1949 = vrot.slane %v1943, 2
        %v1950 = vrot.slane %v1944, 2
        %v1951 = vsel %vm635, %v1949, %v1950
        %v1952 = vrot.slane %v1945, 2
        %v1953 = vsel %vm635, %v1950, %v1952
        %1954 = vrot.lane.b32.xlu0 %v1951, 127
        %v1955 = vpop.permute.xlu0 %1954
        %1956 = vrot.lane.b32.xlu0 %v1953, 127
        %v1957 = vpop.permute.xlu0 %1956
        %v1960 = vadd.f32 %v1884, %v1955
        %v1961 = vadd.f32 %v1885, %v1957
        %s1962 = sld [smem:[#allocation3 + $0x61]]
        %v1963 = vstv %s1962
        %v1964 = vmul.f32 %v1963, %v1477
        %v1965 = vmul.f32 %v1963, %v1478
        %v1966 = vmul.f32 %v1963, %v1479
        %v1970 = vrot.slane %v1964, 2
        %v1971 = vrot.slane %v1965, 2
        %v1972 = vsel %vm635, %v1970, %v1971
        %v1973 = vrot.slane %v1966, 2
        %v1974 = vsel %vm635, %v1971, %v1973
        %1975 = vrot.lane.b32.xlu0 %v1972, 127
        %v1976 = vpop.permute.xlu0 %1975
        %1977 = vrot.lane.b32.xlu0 %v1974, 127
        %v1978 = vpop.permute.xlu0 %1977
        %v1981 = vadd.f32 %v1901, %v1976
        %v1982 = vadd.f32 %v1902, %v1978
        %s1983 = sld [smem:[#allocation3 + $0x85]]
        %v1984 = vstv %s1983
        %v1985 = vmul.f32 %v1984, %v1477
        %v1986 = vmul.f32 %v1984, %v1478
        %v1987 = vmul.f32 %v1984, %v1479
        %v1991 = vrot.slane %v1985, 2
        %v1992 = vrot.slane %v1986, 2
        %v1993 = vsel %vm635, %v1991, %v1992
        %v1994 = vrot.slane %v1987, 2
        %v1995 = vsel %vm635, %v1992, %v1994
        %1996 = vrot.lane.b32.xlu0 %v1993, 127
        %v1997 = vpop.permute.xlu0 %1996
        %1998 = vrot.lane.b32.xlu0 %v1995, 127
        %v1999 = vpop.permute.xlu0 %1998
        %v2002 = vadd.f32 %v1918, %v1997
        %v2003 = vadd.f32 %v1919, %v1999
        %s2004 = sld [smem:[#allocation3 + $0x1a]]
        %v2005 = vstv %s2004
        %v2006 = vmul.f32 %v2005, %v1477
        %v2007 = vmul.f32 %v2005, %v1478
        %v2008 = vmul.f32 %v2005, %v1479
        %v2012 = vrot.slane %v2006, 2
        %v2013 = vrot.slane %v2007, 2
        %v2014 = vsel %vm635, %v2012, %v2013
        %v2015 = vrot.slane %v2008, 2
        %v2016 = vsel %vm635, %v2013, %v2015
        %2017 = vrot.lane.b32.xlu0 %v2014, 126
        %v2018 = vpop.permute.xlu0 %2017
        %2019 = vrot.lane.b32.xlu0 %v2016, 126
        %v2020 = vpop.permute.xlu0 %2019
        %v2023 = vadd.f32 %v1939, %v2018
        %v2024 = vadd.f32 %v1940, %v2020
        %s2025 = sld [smem:[#allocation3 + $0x3e]]
        %v2026 = vstv %s2025
        %v2027 = vmul.f32 %v2026, %v1477
        %v2028 = vmul.f32 %v2026, %v1478
        %v2029 = vmul.f32 %v2026, %v1479
        %v2033 = vrot.slane %v2027, 2
        %v2034 = vrot.slane %v2028, 2
        %v2035 = vsel %vm635, %v2033, %v2034
        %v2036 = vrot.slane %v2029, 2
        %v2037 = vsel %vm635, %v2034, %v2036
        %2038 = vrot.lane.b32.xlu0 %v2035, 126
        %v2039 = vpop.permute.xlu0 %2038
        %2040 = vrot.lane.b32.xlu0 %v2037, 126
        %v2041 = vpop.permute.xlu0 %2040
        %v2044 = vadd.f32 %v1960, %v2039
        %v2045 = vadd.f32 %v1961, %v2041
        %s2046 = sld [smem:[#allocation3 + $0x62]]
        %v2047 = vstv %s2046
        %v2048 = vmul.f32 %v2047, %v1477
        %v2049 = vmul.f32 %v2047, %v1478
        %v2050 = vmul.f32 %v2047, %v1479
        %v2054 = vrot.slane %v2048, 2
        %v2055 = vrot.slane %v2049, 2
        %v2056 = vsel %vm635, %v2054, %v2055
        %v2057 = vrot.slane %v2050, 2
        %v2058 = vsel %vm635, %v2055, %v2057
        %2059 = vrot.lane.b32.xlu0 %v2056, 126
        %v2060 = vpop.permute.xlu0 %2059
        %2061 = vrot.lane.b32.xlu0 %v2058, 126
        %v2062 = vpop.permute.xlu0 %2061
        %v2065 = vadd.f32 %v1981, %v2060
        %v2066 = vadd.f32 %v1982, %v2062
        %s2067 = sld [smem:[#allocation3 + $0x86]]
        %v2068 = vstv %s2067
        %v2069 = vmul.f32 %v2068, %v1477
        %v2070 = vmul.f32 %v2068, %v1478
        %v2071 = vmul.f32 %v2068, %v1479
        %v2075 = vrot.slane %v2069, 2
        %v2076 = vrot.slane %v2070, 2
        %v2077 = vsel %vm635, %v2075, %v2076
        %v2078 = vrot.slane %v2071, 2
        %v2079 = vsel %vm635, %v2076, %v2078
        %2080 = vrot.lane.b32.xlu0 %v2077, 126
        %v2081 = vpop.permute.xlu0 %2080
        %2082 = vrot.lane.b32.xlu0 %v2079, 126
        %v2083 = vpop.permute.xlu0 %2082
        %v2086 = vadd.f32 %v2002, %v2081
        %v2087 = vadd.f32 %v2003, %v2083
        %s2088 = scalar_lea.vmem [#allocation2], 72
        %v2089 = vld [vmem:[%s2088] sm:$0xff]
        %v2090 = vld [vmem:[%s2088 + $0x8] sm:$0xff]
        %v2091 = vld [vmem:[%s2088 + $0x10] sm:$0x3]
        %s2092 = sld [smem:[#allocation3 + $0x1b]]
        %v2093 = vstv %s2092
        %v2094 = vmul.f32 %v2093, %v2089
        %v2095 = vmul.f32 %v2093, %v2090
        %v2096 = vadd.f32 %v2023, %v2094
        %v2097 = vadd.f32 %v2024, %v2095
        %s2098 = sld [smem:[#allocation3 + $0x3f]]
        %v2099 = vstv %s2098
        %v2100 = vmul.f32 %v2099, %v2089
        %v2101 = vmul.f32 %v2099, %v2090
        %v2102 = vadd.f32 %v2044, %v2100
        %v2103 = vadd.f32 %v2045, %v2101
        %s2104 = sld [smem:[#allocation3 + $0x63]]
        %v2105 = vstv %s2104
        %v2106 = vmul.f32 %v2105, %v2089
        %v2107 = vmul.f32 %v2105, %v2090
        %v2108 = vadd.f32 %v2065, %v2106
        %v2109 = vadd.f32 %v2066, %v2107
        %s2110 = sld [smem:[#allocation3 + $0x87]]
        %v2111 = vstv %s2110
        %v2112 = vmul.f32 %v2111, %v2089
        %v2113 = vmul.f32 %v2111, %v2090
        %v2114 = vadd.f32 %v2086, %v2112
        %v2115 = vadd.f32 %v2087, %v2113
        %s2116 = sld [smem:[#allocation3 + $0x1c]]
        %v2117 = vstv %s2116
        %v2118 = vmul.f32 %v2117, %v2089
        %v2119 = vmul.f32 %v2117, %v2090
        %2122 = vrot.lane.b32.xlu0 %v2118, 127
        %v2123 = vpop.permute.xlu0 %2122
        %2124 = vrot.lane.b32.xlu0 %v2119, 127
        %v2125 = vpop.permute.xlu0 %2124
        %v2128 = vadd.f32 %v2096, %v2123
        %v2129 = vadd.f32 %v2097, %v2125
        %s2130 = sld [smem:[#allocation3 + $0x40]]
        %v2131 = vstv %s2130
        %v2132 = vmul.f32 %v2131, %v2089
        %v2133 = vmul.f32 %v2131, %v2090
        %2136 = vrot.lane.b32.xlu0 %v2132, 127
        %v2137 = vpop.permute.xlu0 %2136
        %2138 = vrot.lane.b32.xlu0 %v2133, 127
        %v2139 = vpop.permute.xlu0 %2138
        %v2142 = vadd.f32 %v2102, %v2137
        %v2143 = vadd.f32 %v2103, %v2139
        %s2144 = sld [smem:[#allocation3 + $0x64]]
        %v2145 = vstv %s2144
        %v2146 = vmul.f32 %v2145, %v2089
        %v2147 = vmul.f32 %v2145, %v2090
        %2150 = vrot.lane.b32.xlu0 %v2146, 127
        %v2151 = vpop.permute.xlu0 %2150
        %2152 = vrot.lane.b32.xlu0 %v2147, 127
        %v2153 = vpop.permute.xlu0 %2152
        %v2156 = vadd.f32 %v2108, %v2151
        %v2157 = vadd.f32 %v2109, %v2153
        %s2158 = sld [smem:[#allocation3 + $0x88]]
        %v2159 = vstv %s2158
        %v2160 = vmul.f32 %v2159, %v2089
        %v2161 = vmul.f32 %v2159, %v2090
        %2164 = vrot.lane.b32.xlu0 %v2160, 127
        %v2165 = vpop.permute.xlu0 %2164
        %2166 = vrot.lane.b32.xlu0 %v2161, 127
        %v2167 = vpop.permute.xlu0 %2166
        %v2170 = vadd.f32 %v2114, %v2165
        %v2171 = vadd.f32 %v2115, %v2167
        %s2172 = sld [smem:[#allocation3 + $0x1d]]
        %v2173 = vstv %s2172
        %v2174 = vmul.f32 %v2173, %v2089
        %v2175 = vmul.f32 %v2173, %v2090
        %2178 = vrot.lane.b32.xlu0 %v2174, 126
        %v2179 = vpop.permute.xlu0 %2178
        %2180 = vrot.lane.b32.xlu0 %v2175, 126
        %v2181 = vpop.permute.xlu0 %2180
        %v2184 = vadd.f32 %v2128, %v2179
        %v2185 = vadd.f32 %v2129, %v2181
        %s2186 = sld [smem:[#allocation3 + $0x41]]
        %v2187 = vstv %s2186
        %v2188 = vmul.f32 %v2187, %v2089
        %v2189 = vmul.f32 %v2187, %v2090
        %2192 = vrot.lane.b32.xlu0 %v2188, 126
        %v2193 = vpop.permute.xlu0 %2192
        %2194 = vrot.lane.b32.xlu0 %v2189, 126
        %v2195 = vpop.permute.xlu0 %2194
        %v2198 = vadd.f32 %v2142, %v2193
        %v2199 = vadd.f32 %v2143, %v2195
        %s2200 = sld [smem:[#allocation3 + $0x65]]
        %v2201 = vstv %s2200
        %v2202 = vmul.f32 %v2201, %v2089
        %v2203 = vmul.f32 %v2201, %v2090
        %2206 = vrot.lane.b32.xlu0 %v2202, 126
        %v2207 = vpop.permute.xlu0 %2206
        %2208 = vrot.lane.b32.xlu0 %v2203, 126
        %v2209 = vpop.permute.xlu0 %2208
        %v2212 = vadd.f32 %v2156, %v2207
        %v2213 = vadd.f32 %v2157, %v2209
        %s2214 = sld [smem:[#allocation3 + $0x89]]
        %v2215 = vstv %s2214
        %v2216 = vmul.f32 %v2215, %v2089
        %v2217 = vmul.f32 %v2215, %v2090
        %2220 = vrot.lane.b32.xlu0 %v2216, 126
        %v2221 = vpop.permute.xlu0 %2220
        %2222 = vrot.lane.b32.xlu0 %v2217, 126
        %v2223 = vpop.permute.xlu0 %2222
        %v2226 = vadd.f32 %v2170, %v2221
        %v2227 = vadd.f32 %v2171, %v2223
        %s2228 = sld [smem:[#allocation3 + $0x1e]]
        %v2229 = vstv %s2228
        %v2230 = vmul.f32 %v2229, %v2089
        %v2231 = vmul.f32 %v2229, %v2090
        %v2232 = vmul.f32 %v2229, %v2091
        %v2236 = vrot.slane %v2230, 1
        %v2237 = vrot.slane %v2231, 1
        %v2238 = vsel %vm398, %v2236, %v2237
        %v2239 = vrot.slane %v2232, 1
        %v2240 = vsel %vm398, %v2237, %v2239
        %v2243 = vadd.f32 %v2184, %v2238
        %v2244 = vadd.f32 %v2185, %v2240
        %s2245 = sld [smem:[#allocation3 + $0x42]]
        %v2246 = vstv %s2245
        %v2247 = vmul.f32 %v2246, %v2089
        %v2248 = vmul.f32 %v2246, %v2090
        %v2249 = vmul.f32 %v2246, %v2091
        %v2253 = vrot.slane %v2247, 1
        %v2254 = vrot.slane %v2248, 1
        %v2255 = vsel %vm398, %v2253, %v2254
        %v2256 = vrot.slane %v2249, 1
        %v2257 = vsel %vm398, %v2254, %v2256
        %v2260 = vadd.f32 %v2198, %v2255
        %v2261 = vadd.f32 %v2199, %v2257
        %s2262 = sld [smem:[#allocation3 + $0x66]]
        %v2263 = vstv %s2262
        %v2264 = vmul.f32 %v2263, %v2089
        %v2265 = vmul.f32 %v2263, %v2090
        %v2266 = vmul.f32 %v2263, %v2091
        %v2270 = vrot.slane %v2264, 1
        %v2271 = vrot.slane %v2265, 1
        %v2272 = vsel %vm398, %v2270, %v2271
        %v2273 = vrot.slane %v2266, 1
        %v2274 = vsel %vm398, %v2271, %v2273
        %v2277 = vadd.f32 %v2212, %v2272
        %v2278 = vadd.f32 %v2213, %v2274
        %s2279 = sld [smem:[#allocation3 + $0x8a]]
        %v2280 = vstv %s2279
        %v2281 = vmul.f32 %v2280, %v2089
        %v2282 = vmul.f32 %v2280, %v2090
        %v2283 = vmul.f32 %v2280, %v2091
        %v2287 = vrot.slane %v2281, 1
        %v2288 = vrot.slane %v2282, 1
        %v2289 = vsel %vm398, %v2287, %v2288
        %v2290 = vrot.slane %v2283, 1
        %v2291 = vsel %vm398, %v2288, %v2290
        %v2294 = vadd.f32 %v2226, %v2289
        %v2295 = vadd.f32 %v2227, %v2291
        %s2296 = sld [smem:[#allocation3 + $0x1f]]
        %v2297 = vstv %s2296
        %v2298 = vmul.f32 %v2297, %v2089
        %v2299 = vmul.f32 %v2297, %v2090
        %v2300 = vmul.f32 %v2297, %v2091
        %v2304 = vrot.slane %v2298, 1
        %v2305 = vrot.slane %v2299, 1
        %v2306 = vsel %vm398, %v2304, %v2305
        %v2307 = vrot.slane %v2300, 1
        %v2308 = vsel %vm398, %v2305, %v2307
        %2309 = vrot.lane.b32.xlu0 %v2306, 127
        %v2310 = vpop.permute.xlu0 %2309
        %2311 = vrot.lane.b32.xlu0 %v2308, 127
        %v2312 = vpop.permute.xlu0 %2311
        %v2315 = vadd.f32 %v2243, %v2310
        %v2316 = vadd.f32 %v2244, %v2312
        %s2317 = sld [smem:[#allocation3 + $0x43]]
        %v2318 = vstv %s2317
        %v2319 = vmul.f32 %v2318, %v2089
        %v2320 = vmul.f32 %v2318, %v2090
        %v2321 = vmul.f32 %v2318, %v2091
        %v2325 = vrot.slane %v2319, 1
        %v2326 = vrot.slane %v2320, 1
        %v2327 = vsel %vm398, %v2325, %v2326
        %v2328 = vrot.slane %v2321, 1
        %v2329 = vsel %vm398, %v2326, %v2328
        %2330 = vrot.lane.b32.xlu0 %v2327, 127
        %v2331 = vpop.permute.xlu0 %2330
        %2332 = vrot.lane.b32.xlu0 %v2329, 127
        %v2333 = vpop.permute.xlu0 %2332
        %v2336 = vadd.f32 %v2260, %v2331
        %v2337 = vadd.f32 %v2261, %v2333
        %s2338 = sld [smem:[#allocation3 + $0x67]]
        %v2339 = vstv %s2338
        %v2340 = vmul.f32 %v2339, %v2089
        %v2341 = vmul.f32 %v2339, %v2090
        %v2342 = vmul.f32 %v2339, %v2091
        %v2346 = vrot.slane %v2340, 1
        %v2347 = vrot.slane %v2341, 1
        %v2348 = vsel %vm398, %v2346, %v2347
        %v2349 = vrot.slane %v2342, 1
        %v2350 = vsel %vm398, %v2347, %v2349
        %2351 = vrot.lane.b32.xlu0 %v2348, 127
        %v2352 = vpop.permute.xlu0 %2351
        %2353 = vrot.lane.b32.xlu0 %v2350, 127
        %v2354 = vpop.permute.xlu0 %2353
        %v2357 = vadd.f32 %v2277, %v2352
        %v2358 = vadd.f32 %v2278, %v2354
        %s2359 = sld [smem:[#allocation3 + $0x8b]]
        %v2360 = vstv %s2359
        %v2361 = vmul.f32 %v2360, %v2089
        %v2362 = vmul.f32 %v2360, %v2090
        %v2363 = vmul.f32 %v2360, %v2091
        %v2367 = vrot.slane %v2361, 1
        %v2368 = vrot.slane %v2362, 1
        %v2369 = vsel %vm398, %v2367, %v2368
        %v2370 = vrot.slane %v2363, 1
        %v2371 = vsel %vm398, %v2368, %v2370
        %2372 = vrot.lane.b32.xlu0 %v2369, 127
        %v2373 = vpop.permute.xlu0 %2372
        %2374 = vrot.lane.b32.xlu0 %v2371, 127
        %v2375 = vpop.permute.xlu0 %2374
        %v2378 = vadd.f32 %v2294, %v2373
        %v2379 = vadd.f32 %v2295, %v2375
        %s2380 = sld [smem:[#allocation3 + $0x20]]
        %v2381 = vstv %s2380
        %v2382 = vmul.f32 %v2381, %v2089
        %v2383 = vmul.f32 %v2381, %v2090
        %v2384 = vmul.f32 %v2381, %v2091
        %v2388 = vrot.slane %v2382, 1
        %v2389 = vrot.slane %v2383, 1
        %v2390 = vsel %vm398, %v2388, %v2389
        %v2391 = vrot.slane %v2384, 1
        %v2392 = vsel %vm398, %v2389, %v2391
        %2393 = vrot.lane.b32.xlu0 %v2390, 126
        %v2394 = vpop.permute.xlu0 %2393
        %2395 = vrot.lane.b32.xlu0 %v2392, 126
        %v2396 = vpop.permute.xlu0 %2395
        %v2399 = vadd.f32 %v2315, %v2394
        %v2400 = vadd.f32 %v2316, %v2396
        %s2401 = sld [smem:[#allocation3 + $0x44]]
        %v2402 = vstv %s2401
        %v2403 = vmul.f32 %v2402, %v2089
        %v2404 = vmul.f32 %v2402, %v2090
        %v2405 = vmul.f32 %v2402, %v2091
        %v2409 = vrot.slane %v2403, 1
        %v2410 = vrot.slane %v2404, 1
        %v2411 = vsel %vm398, %v2409, %v2410
        %v2412 = vrot.slane %v2405, 1
        %v2413 = vsel %vm398, %v2410, %v2412
        %2414 = vrot.lane.b32.xlu0 %v2411, 126
        %v2415 = vpop.permute.xlu0 %2414
        %2416 = vrot.lane.b32.xlu0 %v2413, 126
        %v2417 = vpop.permute.xlu0 %2416
        %v2420 = vadd.f32 %v2336, %v2415
        %v2421 = vadd.f32 %v2337, %v2417
        %s2422 = sld [smem:[#allocation3 + $0x68]]
        %v2423 = vstv %s2422
        %v2424 = vmul.f32 %v2423, %v2089
        %v2425 = vmul.f32 %v2423, %v2090
        %v2426 = vmul.f32 %v2423, %v2091
        %v2430 = vrot.slane %v2424, 1
        %v2431 = vrot.slane %v2425, 1
        %v2432 = vsel %vm398, %v2430, %v2431
        %v2433 = vrot.slane %v2426, 1
        %v2434 = vsel %vm398, %v2431, %v2433
        %2435 = vrot.lane.b32.xlu0 %v2432, 126
        %v2436 = vpop.permute.xlu0 %2435
        %2437 = vrot.lane.b32.xlu0 %v2434, 126
        %v2438 = vpop.permute.xlu0 %2437
        %v2441 = vadd.f32 %v2357, %v2436
        %v2442 = vadd.f32 %v2358, %v2438
        %s2443 = sld [smem:[#allocation3 + $0x8c]]
        %v2444 = vstv %s2443
        %v2445 = vmul.f32 %v2444, %v2089
        %v2446 = vmul.f32 %v2444, %v2090
        %v2447 = vmul.f32 %v2444, %v2091
        %v2451 = vrot.slane %v2445, 1
        %v2452 = vrot.slane %v2446, 1
        %v2453 = vsel %vm398, %v2451, %v2452
        %v2454 = vrot.slane %v2447, 1
        %v2455 = vsel %vm398, %v2452, %v2454
        %2456 = vrot.lane.b32.xlu0 %v2453, 126
        %v2457 = vpop.permute.xlu0 %2456
        %2458 = vrot.lane.b32.xlu0 %v2455, 126
        %v2459 = vpop.permute.xlu0 %2458
        %v2462 = vadd.f32 %v2378, %v2457
        %v2463 = vadd.f32 %v2379, %v2459
        %s2464 = sld [smem:[#allocation3 + $0x21]]
        %v2465 = vstv %s2464
        %v2466 = vmul.f32 %v2465, %v2089
        %v2467 = vmul.f32 %v2465, %v2090
        %v2468 = vmul.f32 %v2465, %v2091
        %v2472 = vrot.slane %v2466, 2
        %v2473 = vrot.slane %v2467, 2
        %v2474 = vsel %vm635, %v2472, %v2473
        %v2475 = vrot.slane %v2468, 2
        %v2476 = vsel %vm635, %v2473, %v2475
        %v2479 = vadd.f32 %v2399, %v2474
        %v2480 = vadd.f32 %v2400, %v2476
        %s2481 = sld [smem:[#allocation3 + $0x45]]
        %v2482 = vstv %s2481
        %v2483 = vmul.f32 %v2482, %v2089
        %v2484 = vmul.f32 %v2482, %v2090
        %v2485 = vmul.f32 %v2482, %v2091
        %v2489 = vrot.slane %v2483, 2
        %v2490 = vrot.slane %v2484, 2
        %v2491 = vsel %vm635, %v2489, %v2490
        %v2492 = vrot.slane %v2485, 2
        %v2493 = vsel %vm635, %v2490, %v2492
        %v2496 = vadd.f32 %v2420, %v2491
        %v2497 = vadd.f32 %v2421, %v2493
        %s2498 = sld [smem:[#allocation3 + $0x69]]
        %v2499 = vstv %s2498
        %v2500 = vmul.f32 %v2499, %v2089
        %v2501 = vmul.f32 %v2499, %v2090
        %v2502 = vmul.f32 %v2499, %v2091
        %v2506 = vrot.slane %v2500, 2
        %v2507 = vrot.slane %v2501, 2
        %v2508 = vsel %vm635, %v2506, %v2507
        %v2509 = vrot.slane %v2502, 2
        %v2510 = vsel %vm635, %v2507, %v2509
        %v2513 = vadd.f32 %v2441, %v2508
        %v2514 = vadd.f32 %v2442, %v2510
        %s2515 = sld [smem:[#allocation3 + $0x8d]]
        %v2516 = vstv %s2515
        %v2517 = vmul.f32 %v2516, %v2089
        %v2518 = vmul.f32 %v2516, %v2090
        %v2519 = vmul.f32 %v2516, %v2091
        %v2523 = vrot.slane %v2517, 2
        %v2524 = vrot.slane %v2518, 2
        %v2525 = vsel %vm635, %v2523, %v2524
        %v2526 = vrot.slane %v2519, 2
        %v2527 = vsel %vm635, %v2524, %v2526
        %v2530 = vadd.f32 %v2462, %v2525
        %v2531 = vadd.f32 %v2463, %v2527
        %s2532 = sld [smem:[#allocation3 + $0x22]]
        %v2533 = vstv %s2532
        %v2534 = vmul.f32 %v2533, %v2089
        %v2535 = vmul.f32 %v2533, %v2090
        %v2536 = vmul.f32 %v2533, %v2091
        %v2540 = vrot.slane %v2534, 2
        %v2541 = vrot.slane %v2535, 2
        %v2542 = vsel %vm635, %v2540, %v2541
        %v2543 = vrot.slane %v2536, 2
        %v2544 = vsel %vm635, %v2541, %v2543
        %2545 = vrot.lane.b32.xlu0 %v2542, 127
        %v2546 = vpop.permute.xlu0 %2545
        %2547 = vrot.lane.b32.xlu0 %v2544, 127
        %v2548 = vpop.permute.xlu0 %2547
        %v2551 = vadd.f32 %v2479, %v2546
        %v2552 = vadd.f32 %v2480, %v2548
        %s2553 = sld [smem:[#allocation3 + $0x46]]
        %v2554 = vstv %s2553
        %v2555 = vmul.f32 %v2554, %v2089
        %v2556 = vmul.f32 %v2554, %v2090
        %v2557 = vmul.f32 %v2554, %v2091
        %v2561 = vrot.slane %v2555, 2
        %v2562 = vrot.slane %v2556, 2
        %v2563 = vsel %vm635, %v2561, %v2562
        %v2564 = vrot.slane %v2557, 2
        %v2565 = vsel %vm635, %v2562, %v2564
        %2566 = vrot.lane.b32.xlu0 %v2563, 127
        %v2567 = vpop.permute.xlu0 %2566
        %2568 = vrot.lane.b32.xlu0 %v2565, 127
        %v2569 = vpop.permute.xlu0 %2568
        %v2572 = vadd.f32 %v2496, %v2567
        %v2573 = vadd.f32 %v2497, %v2569
        %s2574 = sld [smem:[#allocation3 + $0x6a]]
        %v2575 = vstv %s2574
        %v2576 = vmul.f32 %v2575, %v2089
        %v2577 = vmul.f32 %v2575, %v2090
        %v2578 = vmul.f32 %v2575, %v2091
        %v2582 = vrot.slane %v2576, 2
        %v2583 = vrot.slane %v2577, 2
        %v2584 = vsel %vm635, %v2582, %v2583
        %v2585 = vrot.slane %v2578, 2
        %v2586 = vsel %vm635, %v2583, %v2585
        %2587 = vrot.lane.b32.xlu0 %v2584, 127
        %v2588 = vpop.permute.xlu0 %2587
        %2589 = vrot.lane.b32.xlu0 %v2586, 127
        %v2590 = vpop.permute.xlu0 %2589
        %v2593 = vadd.f32 %v2513, %v2588
        %v2594 = vadd.f32 %v2514, %v2590
        %s2595 = sld [smem:[#allocation3 + $0x8e]]
        %v2596 = vstv %s2595
        %v2597 = vmul.f32 %v2596, %v2089
        %v2598 = vmul.f32 %v2596, %v2090
        %v2599 = vmul.f32 %v2596, %v2091
        %v2603 = vrot.slane %v2597, 2
        %v2604 = vrot.slane %v2598, 2
        %v2605 = vsel %vm635, %v2603, %v2604
        %v2606 = vrot.slane %v2599, 2
        %v2607 = vsel %vm635, %v2604, %v2606
        %2608 = vrot.lane.b32.xlu0 %v2605, 127
        %v2609 = vpop.permute.xlu0 %2608
        %2610 = vrot.lane.b32.xlu0 %v2607, 127
        %v2611 = vpop.permute.xlu0 %2610
        %v2614 = vadd.f32 %v2530, %v2609
        %v2615 = vadd.f32 %v2531, %v2611
        %s2616 = sld [smem:[#allocation3 + $0x23]]
        %v2617 = vstv %s2616
        %v2618 = vmul.f32 %v2617, %v2089
        %v2619 = vmul.f32 %v2617, %v2090
        %v2620 = vmul.f32 %v2617, %v2091
        %v2624 = vrot.slane %v2618, 2
        %v2625 = vrot.slane %v2619, 2
        %v2626 = vsel %vm635, %v2624, %v2625
        %v2627 = vrot.slane %v2620, 2
        %v2628 = vsel %vm635, %v2625, %v2627
        %2629 = vrot.lane.b32.xlu0 %v2626, 126
        %v2630 = vpop.permute.xlu0 %2629
        %2631 = vrot.lane.b32.xlu0 %v2628, 126
        %v2632 = vpop.permute.xlu0 %2631
        %v2635 = vadd.f32 %v2551, %v2630
        %v2636 = vadd.f32 %v2552, %v2632
        %s2637 = sld [smem:[#allocation3 + $0x47]]
        %v2638 = vstv %s2637
        %v2639 = vmul.f32 %v2638, %v2089
        %v2640 = vmul.f32 %v2638, %v2090
        %v2641 = vmul.f32 %v2638, %v2091
        %v2645 = vrot.slane %v2639, 2
        %v2646 = vrot.slane %v2640, 2
        %v2647 = vsel %vm635, %v2645, %v2646
        %v2648 = vrot.slane %v2641, 2
        %v2649 = vsel %vm635, %v2646, %v2648
        %2650 = vrot.lane.b32.xlu0 %v2647, 126
        %v2651 = vpop.permute.xlu0 %2650
        %2652 = vrot.lane.b32.xlu0 %v2649, 126
        %v2653 = vpop.permute.xlu0 %2652
        %v2656 = vadd.f32 %v2572, %v2651
        %v2657 = vadd.f32 %v2573, %v2653
        %s2658 = sld [smem:[#allocation3 + $0x6b]]
        %v2659 = vstv %s2658
        %v2660 = vmul.f32 %v2659, %v2089
        %v2661 = vmul.f32 %v2659, %v2090
        %v2662 = vmul.f32 %v2659, %v2091
        %v2666 = vrot.slane %v2660, 2
        %v2667 = vrot.slane %v2661, 2
        %v2668 = vsel %vm635, %v2666, %v2667
        %v2669 = vrot.slane %v2662, 2
        %v2670 = vsel %vm635, %v2667, %v2669
        %2671 = vrot.lane.b32.xlu0 %v2668, 126
        %v2672 = vpop.permute.xlu0 %2671
        %2673 = vrot.lane.b32.xlu0 %v2670, 126
        %v2674 = vpop.permute.xlu0 %2673
        %v2677 = vadd.f32 %v2593, %v2672
        %v2678 = vadd.f32 %v2594, %v2674
        %s2679 = sld [smem:[#allocation3 + $0x8f]]
        %v2680 = vstv %s2679
        %v2681 = vmul.f32 %v2680, %v2089
        %v2682 = vmul.f32 %v2680, %v2090
        %v2683 = vmul.f32 %v2680, %v2091
        %v2687 = vrot.slane %v2681, 2
        %v2688 = vrot.slane %v2682, 2
        %v2689 = vsel %vm635, %v2687, %v2688
        %v2690 = vrot.slane %v2683, 2
        %v2691 = vsel %vm635, %v2688, %v2690
        %2692 = vrot.lane.b32.xlu0 %v2689, 126
        %v2693 = vpop.permute.xlu0 %2692
        %2694 = vrot.lane.b32.xlu0 %v2691, 126
        %v2695 = vpop.permute.xlu0 %2694
        %v2698 = vadd.f32 %v2614, %v2693
        %v2699 = vadd.f32 %v2615, %v2695
        %s2700 = sld [smem:[#allocation6]]
        %v2701 = vstv %s2700
        %v2702 = vadd.f32 %v2635, %v2701
        %v2703 = vadd.f32 %v2636, %v2701
        %v2704 = vtanh.pop %v2702
        %v2705 = vtanh.pop %v2703
        %v2706 = vmul.f32 %v2704, 0.5
        %v2707 = vmul.f32 %v2705, 0.5
        %v2708 = vadd.f32 %v2706, 0.5
        %v2709 = vadd.f32 %v2707, 0.5
        %vm2710 = vcmask 130048
        %2711 = vst.msk [vmem:[%s190] sm:$0xff] %vm2710, %v2708
        %2712 = vst.msk [vmem:[%s190 + $0x8] sm:$0xff] %vm2710, %v2709
        %s2713 = sld [smem:[#allocation6 + $0x1]]
        %v2714 = vstv %s2713
        %v2715 = vadd.f32 %v2656, %v2714
        %v2716 = vadd.f32 %v2657, %v2714
        %v2717 = vtanh.pop %v2715
        %v2718 = vtanh.pop %v2716
        %v2719 = vmul.f32 %v2717, 0.5
        %v2720 = vmul.f32 %v2718, 0.5
        %v2721 = vadd.f32 %v2719, 0.5
        %v2722 = vadd.f32 %v2720, 0.5
        %s2723 = scalar_lea.vmem %s190, 16 [#allocation8]
        %2724 = vst.msk [vmem:[%s2723] sm:$0xff] %vm2710, %v2721
        %2725 = vst.msk [vmem:[%s2723 + $0x8] sm:$0xff] %vm2710, %v2722
        %s2726 = sld [smem:[#allocation6 + $0x2]]
        %v2727 = vstv %s2726
        %v2728 = vadd.f32 %v2677, %v2727
        %v2729 = vadd.f32 %v2678, %v2727
        %v2730 = vtanh.pop %v2728
        %v2731 = vtanh.pop %v2729
        %v2732 = vmul.f32 %v2730, 0.5
        %v2733 = vmul.f32 %v2731, 0.5
        %v2734 = vadd.f32 %v2732, 0.5
        %v2735 = vadd.f32 %v2733, 0.5
        %s2736 = scalar_lea.vmem %s190, 32 [#allocation8]
        %2737 = vst.msk [vmem:[%s2736] sm:$0xff] %vm2710, %v2734
        %2738 = vst.msk [vmem:[%s2736 + $0x8] sm:$0xff] %vm2710, %v2735
        %s2739 = sld [smem:[#allocation6 + $0x3]]
        %v2740 = vstv %s2739
        %v2741 = vadd.f32 %v2698, %v2740
        %v2742 = vadd.f32 %v2699, %v2740
        %v2743 = vtanh.pop %v2741
        %v2744 = vtanh.pop %v2742
        %v2745 = vmul.f32 %v2743, 0.5
        %v2746 = vmul.f32 %v2744, 0.5
        %v2747 = vadd.f32 %v2745, 0.5
        %v2748 = vadd.f32 %v2746, 0.5
        %s2749 = scalar_lea.vmem %s190, 48 [#allocation8]
        %2750 = vst.msk [vmem:[%s2749] sm:$0xff] %vm2710, %v2747
        %2751 = vst.msk [vmem:[%s2749 + $0x8] sm:$0xff] %vm2710, %v2748
        %s2752 = sand.u32 %s95, 1
        %s2753 = scalar_lea.sflag [#allocation4], %s2752
        %s2754 = sand.u32 %s95, 1
        %s2755 = smul.addr %s2754, 64
        %s2756 = scalar_lea.vmem [#allocation8], %s2755
        // Predicated region
        $region41: #{conv_out_pallas.1} parent=31 // pred_check
          %p2757 = pneg %p105
        $region42: #{conv_out_pallas.1} parent=31 // pred_check_branch
          %2759 = sbr.rel (%p2757) target = $region44
        $region43: #{conv_out_pallas.1} parent=31 // pred_region
          %s2761 = ssub.s32 1024, 1024
          %2762 = vsyncadd %s2753, %s2761
          %s2763 = smul.addr %s19, 8
          %s2764 = smul.addr %s2763, 128
          %s2765 = scalar_lea.hbm %s3, %s2764
          %s2766 = sshll.u32 %s2756, 4
          %s2767 = int_to_ptr.vmem [resolvable:$true] %s2766
          %2772 = dma.vmem_to_hbm [thread:$0]  %s2767, 1024, %s2765, %s2753, 128, 128, 8
        $region44: #{conv_out_pallas.1} parent=31 // pred_fallthru
          _
      $region32: #{conv_out_pallas.1} parent=5 // pred_fallthru
        _
      %p2773 = scmp.le.s32.totalorder 2, %s14
      // Predicated region
      $region45: #{conv_out_pallas.1} parent=5 // pred_check
        %p2774 = pneg %p2773
      $region46: #{conv_out_pallas.1} parent=5 // pred_check_branch
        %2776 = sbr.rel (%p2774) target = $region48
      $region47: #{conv_out_pallas.1} parent=5 // pred_region
        %s2777 = ssub.s32 %s14, 2
        // Predicated region
        $region49: #{conv_out_pallas.1} parent=47 // pred_check
          %p2778 = pneg %p111
        $region50: #{conv_out_pallas.1} parent=47 // pred_check_branch
          %2780 = sbr.rel (%p2778) target = $region52
        $region51: #{conv_out_pallas.1} parent=47 // pred_region
          %s2781 = sand.u32 %s96, 1
          %s2782 = scalar_lea.sflag [#allocation4], %s2781
          %s2783 = sand.u32 %s96, 1
          %s2784 = smul.addr %s2783, 64
          %s2785 = scalar_lea.vmem [#allocation8], %s2784
          %2786 = dma.done %s2782, 1024
        $region52: #{conv_out_pallas.1} parent=47 // pred_fallthru
          _
      $region48: #{conv_out_pallas.1} parent=5 // pred_fallthru
        _
    $region6: #{conv_out_pallas.1} parent=1 // loop_footer
      %s18 = sadd.s32 1, %s14
    $region7: #{conv_out_pallas.1} parent=1 // loop_footer_branch
      %13 = sbr.rel target = $region3
    $region8: #{conv_out_pallas.1} parent=1 // loop_exit
      _
    %2787 = vsyncpa [#allocation4], 1
    %s2788 = scalar_lea.sflag [#allocation4], 1
    %2789 = vsyncpa %s2788, 1
    %2790 = vsyncpa [#allocation5], 1
    %s2791 = scalar_lea.sflag [#allocation5], 1
    %2792 = vsyncpa %s2791, 1
    %2793 = vsyncpa [#allocation7], 1

</llo_original>
